<compile_context>
chip_gen: v7x
topology: tpu7x:2x2x1
jax: 0.10.0
libtpu: 0.0.40
codegen_flags: <defaults>
</compile_context>

<pallas_src>
import jax
import jax.numpy as jnp
import numpy as np
from jax.experimental import pallas as pl
from jax.experimental.pallas import tpu as pltpu

# ---------------- synthetic config (cfg.MODEL.POINT_HEAD) ----------------
NUM_CLASSES = 4
FC_DIM = 32
NUM_FC = 3
CLS_AGNOSTIC_MASK = False
COARSE_PRED_EACH_LAYER = True
IN_CHANNELS = 8                      # fine-grained feature channels
NUM_MASK_CLASSES = 1 if CLS_AGNOSTIC_MASK else NUM_CLASSES
PRED_PAD = 8                         # predictor rows padded to a full sublane group


# ---------------- Pallas kernel ----------------
def point_head_kernel(fine_ref, coarse_ref, w1_ref, wmain_ref, wc_ref, bias_ref, out_ref):
    fine = fine_ref[...]        # (Cf, TP)   channels on sublanes, points on lanes
    coarse = coarse_ref[...]    # (Cc, TP)
    bias = bias_ref[...]        # (3*FC_DIM + PRED_PAD, 1)

    # Every coarse-feature contribution (fc1..fc3 + predictor) fused into ONE MXU pass.
    cc = jnp.dot(wc_ref[...], coarse, preferred_element_type=jnp.float32)   # (3*FC_DIM+8, TP)

    # fc1: relu(W1a @ fine + W1b @ coarse + b1)
    h = jnp.dot(w1_ref[...], fine, preferred_element_type=jnp.float32)
    h = jnp.maximum(h + cc[0:FC_DIM] + bias[0:FC_DIM], 0.0)

    # fc2
    h = jnp.dot(wmain_ref[0:FC_DIM, :], h, preferred_element_type=jnp.float32)
    h = jnp.maximum(h + cc[FC_DIM:2 * FC_DIM] + bias[FC_DIM:2 * FC_DIM], 0.0)

    # fc3
    h = jnp.dot(wmain_ref[FC_DIM:2 * FC_DIM, :], h, preferred_element_type=jnp.float32)
    h = jnp.maximum(h + cc[2 * FC_DIM:3 * FC_DIM] + bias[2 * FC_DIM:3 * FC_DIM], 0.0)

    # predictor (no relu); rows padded to PRED_PAD, only the first NUM_MASK_CLASSES are real.
    out = jnp.dot(wmain_ref[2 * FC_DIM:2 * FC_DIM + PRED_PAD, :], h,
                  preferred_element_type=jnp.float32)
    out = out + cc[3 * FC_DIM:3 * FC_DIM + PRED_PAD] + bias[3 * FC_DIM:3 * FC_DIM + PRED_PAD]
    out_ref[...] = out[:NUM_MASK_CLASSES].astype(out_ref.dtype)


# ---------------- wrapper ----------------
def point_head_forward(fine_grained_features, coarse_features, params, *, tile_p=512):
    """fine_grained_features: (N, C_fine, P), coarse_features: (N, num_classes, P).
    Returns (N, num_mask_classes, P) — same layout/semantics as the PyTorch module."""
    assert COARSE_PRED_EACH_LAYER, "kernel assumes coarse features are appended at every layer"
    (w1, b1), (w2, b2), (w3, b3), (wp, bp) = params
    N, Cf, P = fine_grained_features.shape
    _, Cc, _ = coarse_features.shape

    # Lane (point) tile: multiple of 128, no larger than the rounded-up point count.
    tile_p = max(128, min(int(tile_p), pl.cdiv(P, 128) * 128))
    tile_p = pl.cdiv(tile_p, 128) * 128
    P_pad = pl.cdiv(P, tile_p) * tile_p
    if P_pad != P:
        pad = ((0, 0), (0, 0), (0, P_pad - P))
        fine_grained_features = jnp.pad(fine_grained_features, pad)
        coarse_features = jnp.pad(coarse_features, pad)

    # Split each conv weight (C_out, C_in_total) into the part applied to the "main"
    # input and the part applied to the appended coarse features; stack into 3 slabs.
    w1a, w1b = w1[:, :Cf], w1[:, Cf:]
    w2a, w2b = w2[:, :FC_DIM], w2[:, FC_DIM:]
    w3a, w3b = w3[:, :FC_DIM], w3[:, FC_DIM:]
    wpa, wpb = wp[:, :FC_DIM], wp[:, FC_DIM:]

    def pad_rows(a, rows):
        return jnp.pad(a, ((0, rows - a.shape[0]), (0, 0)))

    wmain = jnp.concatenate([w2a, w3a, pad_rows(wpa, PRED_PAD)], axis=0)          # (2*FC_DIM+8, FC_DIM)
    wcoarse = jnp.concatenate([w1b, w2b, w3b, pad_rows(wpb, PRED_PAD)], axis=0)   # (3*FC_DIM+8, Cc)
    bias = jnp.concatenate(
        [b1, b2, b3, jnp.pad(bp, (0, PRED_PAD - bp.shape[0]))])[:, None]          # (3*FC_DIM+8, 1)

    full = lambda a: pl.BlockSpec(a.shape, lambda n, p: (0, 0))

    out = pl.pallas_call(
        point_head_kernel,
        out_shape=jax.ShapeDtypeStruct((N, NUM_MASK_CLASSES, P_pad), jnp.float32),
        grid=(N, P_pad // tile_p),
        in_specs=[
            pl.BlockSpec((None, Cf, tile_p), lambda n, p: (n, 0, p)),
            pl.BlockSpec((None, Cc, tile_p), lambda n, p: (n, 0, p)),
            full(w1a), full(wmain), full(wcoarse), full(bias),
        ],
        out_specs=pl.BlockSpec((None, NUM_MASK_CLASSES, tile_p), lambda n, p: (n, 0, p)),
        compiler_params=pltpu.CompilerParams(
            dimension_semantics=("parallel", "parallel")),
    )(fine_grained_features, coarse_features, w1a, wmain, wcoarse, bias)

    return out[:, :, :P] if P_pad != P else out


# ---------------- deterministic parameter init ----------------
def init_params(key):
    keys = jax.random.split(key, 8)
    params = []
    fc_dim_in = IN_CHANNELS + NUM_CLASSES
    for k in range(NUM_FC):
        # c2_msra_fill ~ kaiming normal (std = sqrt(2 / fan_in)), bias = 0
        std = np.sqrt(2.0 / fc_dim_in)
        w = jax.random.normal(keys[2 * k], (FC_DIM, fc_dim_in), jnp.float32) * std
        b = jnp.zeros((FC_DIM,), jnp.float32)
        params.append((w, b))
        fc_dim_in = FC_DIM + (NUM_CLASSES if COARSE_PRED_EACH_LAYER else 0)
    # predictor: normal(std=0.001), bias = 0
    wp = jax.random.normal(keys[6], (NUM_MASK_CLASSES, fc_dim_in), jnp.float32) * 0.001
    bp = jnp.zeros((NUM_MASK_CLASSES,), jnp.float32)
    params.append((wp, bp))
    return params


# ---------------- pure-JAX reference (mirrors the torch forward) ----------------
def point_head_reference(fine, coarse, params):
    x = jnp.concatenate([fine, coarse], axis=1)       # (N, C, P)
    for (w, b) in params[:-1]:
        x = jnp.einsum('oc,ncp->nop', w, x) + b[None, :, None]
        x = jnp.maximum(x, 0.0)
        if COARSE_PRED_EACH_LAYER:
            x = jnp.concatenate([x, coarse], axis=1)
    wp, bp = params[-1]
    return jnp.einsum('oc,ncp->nop', wp, x) + bp[None, :, None]


if __name__ == "__main__":
    key = jax.random.PRNGKey(0)
    k_param, k_fine, k_coarse = jax.random.split(key, 3)
    params = init_params(k_param)

    # Aligned point count.
    N, P = 2, 1024
    fine = jax.random.normal(k_fine, (N, IN_CHANNELS, P), jnp.float32)
    coarse = jax.random.normal(k_coarse, (N, NUM_CLASSES, P), jnp.float32)

    out = jax.block_until_ready(point_head_forward(fine, coarse, params))
    ref = point_head_reference(fine, coarse, params)
    assert out.shape == (N, NUM_MASK_CLASSES, P)
    np.testing.assert_allclose(np.asarray(out), np.asarray(ref), rtol=1e-5, atol=1e-5)

    # Ragged point count (exercises the padding path instead of the old hard assert).
    P2 = 200
    out2 = jax.block_until_ready(
        point_head_forward(fine[:, :, :P2], coarse[:, :, :P2], params))
    ref2 = point_head_reference(fine[:, :, :P2], coarse[:, :, :P2], params)
    assert out2.shape == (N, NUM_MASK_CLASSES, P2)
    np.testing.assert_allclose(np.asarray(out2), np.asarray(ref2), rtol=1e-5, atol=1e-5)

    print("KERNEL_OK")
</pallas_src>

<mosaic_0001>
module attributes {stable_mosaic.version = 11 : i64} {
  func.func @point_head_kernel(%arg0: i32, %arg1: i32, %arg2: memref<1x8x512xf32, #tpu.memory_space<vmem>>, %arg3: memref<1x4x512xf32, #tpu.memory_space<vmem>>, %arg4: memref<32x8xf32, #tpu.memory_space<vmem>>, %arg5: memref<72x32xf32, #tpu.memory_space<vmem>>, %arg6: memref<104x4xf32, #tpu.memory_space<vmem>>, %arg7: memref<104x1xf32, #tpu.memory_space<vmem>>, %arg8: memref<1x4x512xf32, #tpu.memory_space<vmem>>) attributes {dimension_semantics = [#tpu.dimension_semantics<parallel>, #tpu.dimension_semantics<parallel>], iteration_bounds = array<i64: 2, 2>, scalar_prefetch = 0 : i64, scratch_operands = 0 : i64, tpu.core_type = #tpu.core_type<tc>, window_params = [{transform_indices = @transform_0, window_bounds = array<i64: 1, 8, 512>}, {transform_indices = @transform_1, window_bounds = array<i64: 1, 4, 512>}, {pipeline_mode = #tpu.pipeline_mode<synchronous>, transform_indices = @transform_2, window_bounds = array<i64: 32, 8>}, {pipeline_mode = #tpu.pipeline_mode<synchronous>, transform_indices = @transform_3, window_bounds = array<i64: 72, 32>}, {pipeline_mode = #tpu.pipeline_mode<synchronous>, transform_indices = @transform_4, window_bounds = array<i64: 104, 4>}, {pipeline_mode = #tpu.pipeline_mode<synchronous>, transform_indices = @transform_5, window_bounds = array<i64: 104, 1>}, {transform_indices = @transform_6, window_bounds = array<i64: 1, 4, 512>}]} {
    %c0 = arith.constant 0 : index
    %c0_0 = arith.constant 0 : index
    %c0_1 = arith.constant 0 : index
    %0 = vector.load %arg2[%c0, %c0_0, %c0_1] : memref<1x8x512xf32, #tpu.memory_space<vmem>>, vector<1x8x512xf32>
    %1 = vector.shape_cast %0 : vector<1x8x512xf32> to vector<8x512xf32>
    %c0_2 = arith.constant 0 : index
    %c0_3 = arith.constant 0 : index
    %c0_4 = arith.constant 0 : index
    %2 = vector.load %arg3[%c0_2, %c0_3, %c0_4] : memref<1x4x512xf32, #tpu.memory_space<vmem>>, vector<1x4x512xf32>
    %3 = vector.shape_cast %2 : vector<1x4x512xf32> to vector<4x512xf32>
    %c0_5 = arith.constant 0 : index
    %c0_6 = arith.constant 0 : index
    %4 = vector.load %arg7[%c0_5, %c0_6] : memref<104x1xf32, #tpu.memory_space<vmem>>, vector<104x1xf32>
    %c0_7 = arith.constant 0 : index
    %c0_8 = arith.constant 0 : index
    %5 = vector.load %arg6[%c0_7, %c0_8] : memref<104x4xf32, #tpu.memory_space<vmem>>, vector<104x4xf32>
    %cst = arith.constant dense<0.000000e+00> : vector<104x512xf32>
    %6 = tpu.matmul %5, %3, %cst {dimension_numbers = #tpu.dot_dimension_numbers<[1], [0], [0], [1], [0, 0, 1, 1], [], []>} : vector<104x4xf32>, vector<4x512xf32>, vector<104x512xf32> -> vector<104x512xf32>
    %c0_9 = arith.constant 0 : index
    %c0_10 = arith.constant 0 : index
    %7 = vector.load %arg4[%c0_9, %c0_10] : memref<32x8xf32, #tpu.memory_space<vmem>>, vector<32x8xf32>
    %cst_11 = arith.constant dense<0.000000e+00> : vector<32x512xf32>
    %8 = tpu.matmul %7, %1, %cst_11 {dimension_numbers = #tpu.dot_dimension_numbers<[1], [0], [0], [1], [0, 0, 1, 1], [], []>} : vector<32x8xf32>, vector<8x512xf32>, vector<32x512xf32> -> vector<32x512xf32>
    %9 = vector.extract_strided_slice %6 {offsets = [0, 0], sizes = [32, 512], strides = [1, 1]} : vector<104x512xf32> to vector<32x512xf32>
    %10 = arith.addf %8, %9 : vector<32x512xf32>
    %11 = vector.extract_strided_slice %4 {offsets = [0, 0], sizes = [32, 1], strides = [1, 1]} : vector<104x1xf32> to vector<32x1xf32>
    %12 = vector.broadcast %11 : vector<32x1xf32> to vector<32x512xf32>
    %13 = arith.addf %10, %12 : vector<32x512xf32>
    %cst_12 = arith.constant 0.000000e+00 : f32
    %14 = vector.broadcast %cst_12 : f32 to vector<32x512xf32>
    %15 = arith.maximumf %13, %14 : vector<32x512xf32>
    %c0_13 = arith.constant 0 : index
    %c0_14 = arith.constant 0 : index
    %16 = vector.load %arg5[%c0_13, %c0_14] : memref<72x32xf32, #tpu.memory_space<vmem>>, vector<32x32xf32>
    %cst_15 = arith.constant dense<0.000000e+00> : vector<32x512xf32>
    %17 = tpu.matmul %16, %15, %cst_15 {dimension_numbers = #tpu.dot_dimension_numbers<[1], [0], [0], [1], [0, 0, 1, 1], [], []>} : vector<32x32xf32>, vector<32x512xf32>, vector<32x512xf32> -> vector<32x512xf32>
    %18 = vector.extract_strided_slice %6 {offsets = [32, 0], sizes = [32, 512], strides = [1, 1]} : vector<104x512xf32> to vector<32x512xf32>
    %19 = arith.addf %17, %18 : vector<32x512xf32>
    %20 = vector.extract_strided_slice %4 {offsets = [32, 0], sizes = [32, 1], strides = [1, 1]} : vector<104x1xf32> to vector<32x1xf32>
    %21 = vector.broadcast %20 : vector<32x1xf32> to vector<32x512xf32>
    %22 = arith.addf %19, %21 : vector<32x512xf32>
    %cst_16 = arith.constant 0.000000e+00 : f32
    %23 = vector.broadcast %cst_16 : f32 to vector<32x512xf32>
    %24 = arith.maximumf %22, %23 : vector<32x512xf32>
    %c32 = arith.constant 32 : index
    %c0_17 = arith.constant 0 : index
    %25 = vector.load %arg5[%c32, %c0_17] : memref<72x32xf32, #tpu.memory_space<vmem>>, vector<32x32xf32>
    %cst_18 = arith.constant dense<0.000000e+00> : vector<32x512xf32>
    %26 = tpu.matmul %25, %24, %cst_18 {dimension_numbers = #tpu.dot_dimension_numbers<[1], [0], [0], [1], [0, 0, 1, 1], [], []>} : vector<32x32xf32>, vector<32x512xf32>, vector<32x512xf32> -> vector<32x512xf32>
    %27 = vector.extract_strided_slice %6 {offsets = [64, 0], sizes = [32, 512], strides = [1, 1]} : vector<104x512xf32> to vector<32x512xf32>
    %28 = arith.addf %26, %27 : vector<32x512xf32>
    %29 = vector.extract_strided_slice %4 {offsets = [64, 0], sizes = [32, 1], strides = [1, 1]} : vector<104x1xf32> to vector<32x1xf32>
    %30 = vector.broadcast %29 : vector<32x1xf32> to vector<32x512xf32>
    %31 = arith.addf %28, %30 : vector<32x512xf32>
    %cst_19 = arith.constant 0.000000e+00 : f32
    %32 = vector.broadcast %cst_19 : f32 to vector<32x512xf32>
    %33 = arith.maximumf %31, %32 : vector<32x512xf32>
    %c64 = arith.constant 64 : index
    %c0_20 = arith.constant 0 : index
    %34 = vector.load %arg5[%c64, %c0_20] : memref<72x32xf32, #tpu.memory_space<vmem>>, vector<8x32xf32>
    %cst_21 = arith.constant dense<0.000000e+00> : vector<8x512xf32>
    %35 = tpu.matmul %34, %33, %cst_21 {dimension_numbers = #tpu.dot_dimension_numbers<[1], [0], [0], [1], [0, 0, 1, 1], [], []>} : vector<8x32xf32>, vector<32x512xf32>, vector<8x512xf32> -> vector<8x512xf32>
    %36 = vector.extract_strided_slice %6 {offsets = [96, 0], sizes = [8, 512], strides = [1, 1]} : vector<104x512xf32> to vector<8x512xf32>
    %37 = arith.addf %35, %36 : vector<8x512xf32>
    %38 = vector.extract_strided_slice %4 {offsets = [96, 0], sizes = [8, 1], strides = [1, 1]} : vector<104x1xf32> to vector<8x1xf32>
    %39 = vector.broadcast %38 : vector<8x1xf32> to vector<8x512xf32>
    %40 = arith.addf %37, %39 : vector<8x512xf32>
    %41 = vector.extract_strided_slice %40 {offsets = [0, 0], sizes = [4, 512], strides = [1, 1]} : vector<8x512xf32> to vector<4x512xf32>
    %c0_22 = arith.constant 0 : index
    %c0_23 = arith.constant 0 : index
    %c0_24 = arith.constant 0 : index
    %42 = vector.load %arg8[%c0_22, %c0_23, %c0_24] : memref<1x4x512xf32, #tpu.memory_space<vmem>>, vector<1x4x512xf32>
    %43 = vector.shape_cast %42 : vector<1x4x512xf32> to vector<4x512xf32>
    %44 = vector.shape_cast %41 : vector<4x512xf32> to vector<1x4x512xf32>
    tpu.vector_store %arg8[%c0_22, %c0_23, %c0_24], %44 {strides = array<i32>} : memref<1x4x512xf32, #tpu.memory_space<vmem>>, vector<1x4x512xf32>,
    return
  }
  func.func @transform_0(%arg0: i32, %arg1: i32) -> (i32, i32, i32) {
    %c0_i32 = arith.constant 0 : i32
    %c0_i32_0 = arith.constant 0 : i32
    return %arg0, %c0_i32, %arg1 : i32, i32, i32
  }
  func.func @transform_1(%arg0: i32, %arg1: i32) -> (i32, i32, i32) {
    %c0_i32 = arith.constant 0 : i32
    %c0_i32_0 = arith.constant 0 : i32
    return %arg0, %c0_i32, %arg1 : i32, i32, i32
  }
  func.func @transform_2(%arg0: i32, %arg1: i32) -> (i32, i32) {
    %c0_i32 = arith.constant 0 : i32
    %c0_i32_0 = arith.constant 0 : i32
    %c0_i32_1 = arith.constant 0 : i32
    return %c0_i32, %c0_i32_0 : i32, i32
  }
  func.func @transform_3(%arg0: i32, %arg1: i32) -> (i32, i32) {
    %c0_i32 = arith.constant 0 : i32
    %c0_i32_0 = arith.constant 0 : i32
    %c0_i32_1 = arith.constant 0 : i32
    return %c0_i32, %c0_i32_0 : i32, i32
  }
  func.func @transform_4(%arg0: i32, %arg1: i32) -> (i32, i32) {
    %c0_i32 = arith.constant 0 : i32
    %c0_i32_0 = arith.constant 0 : i32
    %c0_i32_1 = arith.constant 0 : i32
    return %c0_i32, %c0_i32_0 : i32, i32
  }
  func.func @transform_5(%arg0: i32, %arg1: i32) -> (i32, i32) {
    %c0_i32 = arith.constant 0 : i32
    %c0_i32_0 = arith.constant 0 : i32
    %c0_i32_1 = arith.constant 0 : i32
    return %c0_i32, %c0_i32_0 : i32, i32
  }
  func.func @transform_6(%arg0: i32, %arg1: i32) -> (i32, i32, i32) {
    %c0_i32 = arith.constant 0 : i32
    %c0_i32_0 = arith.constant 0 : i32
    return %arg0, %c0_i32, %arg1 : i32, i32, i32
  }
}

</mosaic_0001>

<llo_original>
// kernel: tpu_custom_call.1
$region0: #{tpu_custom_call.1}
  #allocation0 [shape = 'u32[]', space=smem, size = 0x4, offset = 0x4, fixed_abs, tag = 'smem constant byte address 0x4 - core index']
  #allocation1 [shape = 'u32[144,128]{1,0:T(1,128)}', space=vmem, size = 0x12000, scoped, tag = 'internal scratch']
  %s0 = inlined_call_operand.vmem [shape: f32[2,8,1024], index: 0, kind: input, shape index: {}]
  %s1 = inlined_call_operand.vmem [shape: f32[2,4,1024], index: 1, kind: input, shape index: {}]
  %s2 = inlined_call_operand.vmem [shape: f32[32,8], index: 2, kind: input, shape index: {}]
  %s3 = inlined_call_operand.vmem [shape: f32[72,32], index: 3, kind: input, shape index: {}]
  %s4 = inlined_call_operand.vmem [shape: f32[104,4], index: 4, kind: input, shape index: {}]
  %s5 = inlined_call_operand.vmem [shape: f32[104,1], index: 5, kind: input, shape index: {}]
  %s6 = inlined_call_operand.hbm [shape: f32[2,4,1024], index: 6, kind: output, shape index: {}]
  %s7 = sld [smem:[#allocation0]]
  $region57: #{tpu_custom_call.1} parent=0
    _
  %s9 = ssub.s32 1, %s7
  %s10 = scalar_select 0, %s9, %s7
  $region1: #{tpu_custom_call.1} parent=0
    #allocation2 [shape = 'u8[16384]{0}', space=vmem, size = 0x4000, scoped, tag = 'output window, operand 0']
    #allocation3 [shape = 's32[2]{0}', space=sflag, size = 0x8, scoped, tag = 'scoped memory for tpu_custom_call.1']
    %11 = vsyncpa [#allocation3], 0
    %s12 = scalar_lea.sflag [#allocation3], 1
    %13 = vsyncpa %s12, 0
    loop: start=0, step=1, limit=6
    $region2: #{tpu_custom_call.1} parent=1 // loop_pre_header
      _
    $region3: #{tpu_custom_call.1} parent=1 // loop_header
      %s15 = sphi 0, %s19
      %p16 = scmp.ge.s32.totalorder %s15, 6
      %s22 = sphi 0, %s34
      %s23 = sphi 0, %s30
      %s24 = sphi 0, %s22
      %s25 = sphi 0, %s23
      %s26 = sphi 0, %s24
      %s27 = sphi 0, %s25
      %s39 = sphi 0, %s41
      %s42 = sphi 0, %s39
      %s43 = sphi 0, %s42
      %s59 = sphi 0, %s43
      %s67 = sphi 0, %s69
      %s70 = sphi 0, %s67
      %s71 = sphi 0, %s70
      %s87 = sphi 0, %s71
      %s91 = sphi 0, %s91
      %s93 = sphi 0, %s91
      %s94 = sphi 0, %s93
      %s108 = sphi 0, %s94
      %s112 = sphi 0, %s112
      %s114 = sphi 0, %s112
      %s115 = sphi 0, %s114
      %s129 = sphi 0, %s115
      %s133 = sphi 0, %s133
      %s135 = sphi 0, %s133
      %s136 = sphi 0, %s135
      %s150 = sphi 0, %s136
      %s154 = sphi 0, %s154
      %s156 = sphi 0, %s154
      %s157 = sphi 0, %s156
      %s171 = sphi 0, %s157
      %s179 = sphi 0, %s181
      %s182 = sphi 0, %s179
      %s183 = sphi 0, %s182
      %s199 = sphi 0, %s183
    $region4: #{tpu_custom_call.1} parent=1 // loop_header_branch
      %18 = sbr.rel (%p16) target = $region8
    $region5: #{tpu_custom_call.1} parent=1 // loop_body
      %s20 = ssub.s32 %s15, 1
      %s21 = ssub.s32 %s15, 2
      %s28 = sadd.s32 1, %s23
      %p29 = scmp.ge.s32.totalorder %s28, 2
      %s30 = scalar_select %p29, 0, %s28
      %s31 = sadd.s32 1, %s22
      %s32 = scalar_select %p29, %s31, %s22
      %p33 = scmp.ge.s32.totalorder %s32, 2
      %s34 = scalar_select %p33, 0, %s32
      %s35 = ssub.s32 %s22, %s34
      %s36 = ssub.s32 %s23, %s30
      %s37 = sor.u32 %s35, %s36
      %p38 = scmp.eq.s32.totalorder %s37, 0
      %s40 = sadd.s32 %s39, 1
      %s41 = scalar_select %p38, %s39, %s40
      %p44 = pneg %p38
      %p45 = scmp.eq.s32.totalorder %s15, 3
      %p46 = por %p44, %p45
      %p47 = scmp.ne.s32.totalorder %s39, %s42
      %p48 = scmp.eq.s32.totalorder %s15, 0
      %p49 = por %p47, %p48
      %p50 = scmp.ne.s32.totalorder %s39, %s42
      %p51 = scmp.eq.s32.totalorder %s20, 3
      %p52 = por %p50, %p51
      %p53 = scmp.ne.s32.totalorder %s42, %s43
      %p54 = scmp.eq.s32.totalorder %s20, 0
      %p55 = por %p53, %p54
      %p56 = scmp.ne.s32.totalorder %s42, %s43
      %p57 = scmp.eq.s32.totalorder %s21, 3
      %p58 = por %p56, %p57
      %p60 = scmp.ne.s32.totalorder %s43, %s59
      %p61 = scmp.eq.s32.totalorder %s21, 0
      %p62 = por %p60, %p61
      %s63 = ssub.s32 %s22, %s34
      %s64 = ssub.s32 %s23, %s30
      %s65 = sor.u32 %s63, %s64
      %p66 = scmp.eq.s32.totalorder %s65, 0
      %s68 = sadd.s32 %s67, 1
      %s69 = scalar_select %p66, %s67, %s68
      %p72 = pneg %p66
      %p73 = scmp.eq.s32.totalorder %s15, 3
      %p74 = por %p72, %p73
      %p75 = scmp.ne.s32.totalorder %s67, %s70
      %p76 = scmp.eq.s32.totalorder %s15, 0
      %p77 = por %p75, %p76
      %p78 = scmp.ne.s32.totalorder %s67, %s70
      %p79 = scmp.eq.s32.totalorder %s20, 3
      %p80 = por %p78, %p79
      %p81 = scmp.ne.s32.totalorder %s70, %s71
      %p82 = scmp.eq.s32.totalorder %s20, 0
      %p83 = por %p81, %p82
      %p84 = scmp.ne.s32.totalorder %s70, %s71
      %p85 = scmp.eq.s32.totalorder %s21, 3
      %p86 = por %p84, %p85
      %p88 = scmp.ne.s32.totalorder %s71, %s87
      %p89 = scmp.eq.s32.totalorder %s21, 0
      %p90 = por %p88, %p89
      %s92 = sadd.s32 %s91, 1
      %p95 = scmp.eq.s32.totalorder %s15, 3
      %p96 = scmp.ne.s32.totalorder %s91, %s93
      %p97 = scmp.eq.s32.totalorder %s15, 0
      %p98 = por %p96, %p97
      %p99 = scmp.ne.s32.totalorder %s91, %s93
      %p100 = scmp.eq.s32.totalorder %s20, 3
      %p101 = por %p99, %p100
      %p102 = scmp.ne.s32.totalorder %s93, %s94
      %p103 = scmp.eq.s32.totalorder %s20, 0
      %p104 = por %p102, %p103
      %p105 = scmp.ne.s32.totalorder %s93, %s94
      %p106 = scmp.eq.s32.totalorder %s21, 3
      %p107 = por %p105, %p106
      %p109 = scmp.ne.s32.totalorder %s94, %s108
      %p110 = scmp.eq.s32.totalorder %s21, 0
      %p111 = por %p109, %p110
      %s113 = sadd.s32 %s112, 1
      %p116 = scmp.eq.s32.totalorder %s15, 3
      %p117 = scmp.ne.s32.totalorder %s112, %s114
      %p118 = scmp.eq.s32.totalorder %s15, 0
      %p119 = por %p117, %p118
      %p120 = scmp.ne.s32.totalorder %s112, %s114
      %p121 = scmp.eq.s32.totalorder %s20, 3
      %p122 = por %p120, %p121
      %p123 = scmp.ne.s32.totalorder %s114, %s115
      %p124 = scmp.eq.s32.totalorder %s20, 0
      %p125 = por %p123, %p124
      %p126 = scmp.ne.s32.totalorder %s114, %s115
      %p127 = scmp.eq.s32.totalorder %s21, 3
      %p128 = por %p126, %p127
      %p130 = scmp.ne.s32.totalorder %s115, %s129
      %p131 = scmp.eq.s32.totalorder %s21, 0
      %p132 = por %p130, %p131
      %s134 = sadd.s32 %s133, 1
      %p137 = scmp.eq.s32.totalorder %s15, 3
      %p138 = scmp.ne.s32.totalorder %s133, %s135
      %p139 = scmp.eq.s32.totalorder %s15, 0
      %p140 = por %p138, %p139
      %p141 = scmp.ne.s32.totalorder %s133, %s135
      %p142 = scmp.eq.s32.totalorder %s20, 3
      %p143 = por %p141, %p142
      %p144 = scmp.ne.s32.totalorder %s135, %s136
      %p145 = scmp.eq.s32.totalorder %s20, 0
      %p146 = por %p144, %p145
      %p147 = scmp.ne.s32.totalorder %s135, %s136
      %p148 = scmp.eq.s32.totalorder %s21, 3
      %p149 = por %p147, %p148
      %p151 = scmp.ne.s32.totalorder %s136, %s150
      %p152 = scmp.eq.s32.totalorder %s21, 0
      %p153 = por %p151, %p152
      %s155 = sadd.s32 %s154, 1
      %p158 = scmp.eq.s32.totalorder %s15, 3
      %p159 = scmp.ne.s32.totalorder %s154, %s156
      %p160 = scmp.eq.s32.totalorder %s15, 0
      %p161 = por %p159, %p160
      %p162 = scmp.ne.s32.totalorder %s154, %s156
      %p163 = scmp.eq.s32.totalorder %s20, 3
      %p164 = por %p162, %p163
      %p165 = scmp.ne.s32.totalorder %s156, %s157
      %p166 = scmp.eq.s32.totalorder %s20, 0
      %p167 = por %p165, %p166
      %p168 = scmp.ne.s32.totalorder %s156, %s157
      %p169 = scmp.eq.s32.totalorder %s21, 3
      %p170 = por %p168, %p169
      %p172 = scmp.ne.s32.totalorder %s157, %s171
      %p173 = scmp.eq.s32.totalorder %s21, 0
      %p174 = por %p172, %p173
      %s175 = ssub.s32 %s22, %s34
      %s176 = ssub.s32 %s23, %s30
      %s177 = sor.u32 %s175, %s176
      %p178 = scmp.eq.s32.totalorder %s177, 0
      %s180 = sadd.s32 %s179, 1
      %s181 = scalar_select %p178, %s179, %s180
      %p184 = pneg %p178
      %p185 = scmp.eq.s32.totalorder %s15, 3
      %p186 = por %p184, %p185
      %p187 = scmp.ne.s32.totalorder %s179, %s182
      %p188 = scmp.eq.s32.totalorder %s15, 0
      %p189 = por %p187, %p188
      %p190 = scmp.ne.s32.totalorder %s179, %s182
      %p191 = scmp.eq.s32.totalorder %s20, 3
      %p192 = por %p190, %p191
      %p193 = scmp.ne.s32.totalorder %s182, %s183
      %p194 = scmp.eq.s32.totalorder %s20, 0
      %p195 = por %p193, %p194
      %p196 = scmp.ne.s32.totalorder %s182, %s183
      %p197 = scmp.eq.s32.totalorder %s21, 3
      %p198 = por %p196, %p197
      %p200 = scmp.ne.s32.totalorder %s183, %s199
      %p201 = scmp.eq.s32.totalorder %s21, 0
      %p202 = por %p200, %p201
      %p203 = scmp.le.s32.totalorder 1, %s15
      %p204 = scmp.lt.s32.totalorder %s15, 5
      %p205 = pnand %p203, %p204
      %p206 = pneg %p205
      // Predicated region
      $region9: #{tpu_custom_call.1} parent=5 // pred_check
        _
      $region10: #{tpu_custom_call.1} parent=5 // pred_check_branch
        %208 = sbr.rel (%p205) target = $region12
      $region11: #{tpu_custom_call.1} parent=5 // pred_region
        %s209 = ssub.s32 %s15, 1
        // Predicated region
        $region13: #{tpu_custom_call.1} parent=11 // pred_check
          %p210 = pneg %p104
        $region14: #{tpu_custom_call.1} parent=11 // pred_check_branch
          %212 = sbr.rel (%p210) target = $region16
        $region15: #{tpu_custom_call.1} parent=11 // pred_region
          _
        $region16: #{tpu_custom_call.1} parent=11 // pred_fallthru
          _
        // Predicated region
        $region17: #{tpu_custom_call.1} parent=11 // pred_check
          %p213 = pneg %p125
        $region18: #{tpu_custom_call.1} parent=11 // pred_check_branch
          %215 = sbr.rel (%p213) target = $region20
        $region19: #{tpu_custom_call.1} parent=11 // pred_region
          _
        $region20: #{tpu_custom_call.1} parent=11 // pred_fallthru
          _
        // Predicated region
        $region21: #{tpu_custom_call.1} parent=11 // pred_check
          %p216 = pneg %p146
        $region22: #{tpu_custom_call.1} parent=11 // pred_check_branch
          %218 = sbr.rel (%p216) target = $region24
        $region23: #{tpu_custom_call.1} parent=11 // pred_region
          _
        $region24: #{tpu_custom_call.1} parent=11 // pred_fallthru
          _
        // Predicated region
        $region25: #{tpu_custom_call.1} parent=11 // pred_check
          %p219 = pneg %p167
        $region26: #{tpu_custom_call.1} parent=11 // pred_check_branch
          %221 = sbr.rel (%p219) target = $region28
        $region27: #{tpu_custom_call.1} parent=11 // pred_region
          _
        $region28: #{tpu_custom_call.1} parent=11 // pred_fallthru
          _
      $region12: #{tpu_custom_call.1} parent=5 // pred_fallthru
        _
      %p222 = scmp.lt.s32.totalorder %s15, 4
      // Predicated region
      $region29: #{tpu_custom_call.1} parent=5 // pred_check
        %p223 = pneg %p222
      $region30: #{tpu_custom_call.1} parent=5 // pred_check_branch
        %225 = sbr.rel (%p223) target = $region32
      $region31: #{tpu_custom_call.1} parent=5 // pred_region
        // Predicated region
        $region33: #{tpu_custom_call.1} parent=31 // pred_check
          %p226 = pneg %p49
        $region34: #{tpu_custom_call.1} parent=31 // pred_check_branch
          %228 = sbr.rel (%p226) target = $region36
        $region35: #{tpu_custom_call.1} parent=31 // pred_region
          %s229 = smul.u32 4, %s23
          %p230 = scmp.lt.s32.totalorder %s22, 1
          %s231 = scalar_select %p230, %s22, 1
          %p232 = scmp.lt.s32.totalorder %s229, 7
          %s233 = scalar_select %p232, %s229, 7
          %s234 = smul.addr %s231, 8
          %s235 = sadd.s32 %s233, %s234
          %s236 = smul.addr %s235, 8
          %s237 = scalar_lea.vmem %s0, %s236
          %s238 = smul.u32 4, %s23
        $region36: #{tpu_custom_call.1} parent=31 // pred_fallthru
          _
        // Predicated region
        $region37: #{tpu_custom_call.1} parent=31 // pred_check
          %p239 = pneg %p77
        $region38: #{tpu_custom_call.1} parent=31 // pred_check_branch
          %241 = sbr.rel (%p239) target = $region40
        $region39: #{tpu_custom_call.1} parent=31 // pred_region
          %s242 = smul.u32 4, %s23
          %p243 = scmp.lt.s32.totalorder %s22, 1
          %s244 = scalar_select %p243, %s22, 1
          %p245 = scmp.lt.s32.totalorder %s242, 7
          %s246 = scalar_select %p245, %s242, 7
          %s247 = smul.addr %s244, 8
          %s248 = sadd.s32 %s246, %s247
          %s249 = smul.addr %s248, 4
          %s250 = scalar_lea.vmem %s1, %s249
          %s251 = smul.u32 4, %s23
        $region40: #{tpu_custom_call.1} parent=31 // pred_fallthru
          _
      $region32: #{tpu_custom_call.1} parent=5 // pred_fallthru
        _
      %p252 = scmp.le.s32.totalorder 1, %s15
      %p253 = scmp.lt.s32.totalorder %s15, 5
      %p254 = pnand %p252, %p253
      %p255 = pneg %p254
      // Predicated region
      $region41: #{tpu_custom_call.1} parent=5 // pred_check
        _
      $region42: #{tpu_custom_call.1} parent=5 // pred_check_branch
        %257 = sbr.rel (%p254) target = $region44
      $region43: #{tpu_custom_call.1} parent=5 // pred_region
        %s258 = ssub.s32 %s15, 1
        %s259 = smul.u32 4, %s25
        %p260 = scmp.lt.s32.totalorder %s24, 1
        %s261 = scalar_select %p260, %s24, 1
        %p262 = scmp.lt.s32.totalorder %s259, 7
        %s263 = scalar_select %p262, %s259, 7
        %s264 = smul.addr %s261, 8
        %s265 = sadd.s32 %s263, %s264
        %s266 = smul.addr %s265, 8
        %s267 = scalar_lea.vmem %s0, %s266
        %p268 = pneg %p55
        %p269 = pneg %p52
        %s270 = smul.u32 4, %s25
        %p271 = scmp.lt.s32.totalorder %s24, 1
        %s272 = scalar_select %p271, %s24, 1
        %p273 = scmp.lt.s32.totalorder %s270, 7
        %s274 = scalar_select %p273, %s270, 7
        %s275 = smul.addr %s272, 8
        %s276 = sadd.s32 %s274, %s275
        %s277 = smul.addr %s276, 4
        %s278 = scalar_lea.vmem %s1, %s277
        %p279 = pneg %p83
        %p280 = pneg %p80
        %p281 = pneg %p104
        %p282 = pneg %p101
        %p283 = pneg %p125
        %p284 = pneg %p122
        %p285 = pneg %p146
        %p286 = pneg %p143
        %p287 = pneg %p167
        %p288 = pneg %p164
        %p289 = pneg %p195
        %p290 = pneg %p192
        %s291 = sand.u32 %s182, 1
        %s292 = scalar_lea.sflag [#allocation3], %s291
        %s293 = sand.u32 %s182, 1
        %s294 = smul.addr %s293, 16
        %s295 = scalar_lea.vmem [#allocation2], %s294
        %s296 = smul.u32 4, %s25
        %p297 = scmp.lt.s32.totalorder %s24, 1
        %s298 = scalar_select %p297, %s24, 1
        %p299 = scmp.lt.s32.totalorder %s296, 7
        %s300 = scalar_select %p299, %s296, 7
        %s301 = smul.addr %s298, 8
        %s302 = sadd.s32 %s300, %s301
        %s303 = smul.addr %s302, 8
        %s304 = scalar_lea.vmem %s0, %s303
        %s305 = smul.u32 4, %s25
        %s306 = smul.u32 4, %s25
        %p307 = scmp.lt.s32.totalorder %s24, 1
        %s308 = scalar_select %p307, %s24, 1
        %p309 = scmp.lt.s32.totalorder %s306, 7
        %s310 = scalar_select %p309, %s306, 7
        %s311 = smul.addr %s308, 8
        %s312 = sadd.s32 %s310, %s311
        %s313 = smul.addr %s312, 4
        %s314 = scalar_lea.vmem %s1, %s313
        %s315 = smul.u32 4, %s25
        %s316 = smul.u32 4, %s25
        %v317 = vld [vmem:[%s304] sm:$0xff]
        %v318 = vld [vmem:[%s304 + $0x8] sm:$0xff]
        %v319 = vld [vmem:[%s304 + $0x10] sm:$0xff]
        %v320 = vld [vmem:[%s304 + $0x18] sm:$0xff]
        %v321 = vld [vmem:[%s314] sm:$0xff]
        %v322 = vld [vmem:[%s314 + $0x8] sm:$0xff]
        %v323 = vld [vmem:[%s5] sm:$0xff]
        %v324 = vld [vmem:[%s5 + $0x8] sm:$0xff]
        %v325 = vld [vmem:[%s5 + $0x10] sm:$0xff]
        %v326 = vld [vmem:[%s5 + $0x18] sm:$0xff]
        %v327 = vld [vmem:[%s5 + $0x20] sm:$0xff]
        %v328 = vld [vmem:[%s5 + $0x28] sm:$0xff]
        %v329 = vld [vmem:[%s5 + $0x30] sm:$0xff]
        %v330 = vld [vmem:[%s5 + $0x38] sm:$0xff]
        %v331 = vld [vmem:[%s5 + $0x40] sm:$0xff]
        %v332 = vld [vmem:[%s5 + $0x48] sm:$0xff]
        %v333 = vld [vmem:[%s5 + $0x50] sm:$0xff]
        %v334 = vld [vmem:[%s5 + $0x58] sm:$0xff]
        %v335 = vld [vmem:[%s5 + $0x60] sm:$0xff]
        %v336 = vld [vmem:[%s4] sm:$0xff]
        %v337 = vld [vmem:[%s4 + $0x8] sm:$0xff]
        %v338 = vld [vmem:[%s4 + $0x10] sm:$0xff]
        %v339 = vld [vmem:[%s4 + $0x18] sm:$0xff]
        %v340 = vld [vmem:[%s4 + $0x20] sm:$0xff]
        %v341 = vld [vmem:[%s4 + $0x28] sm:$0xff]
        %v342 = vld [vmem:[%s4 + $0x30] sm:$0xff]
        %v343 = vld [vmem:[%s4 + $0x38] sm:$0xff]
        %v344 = vld [vmem:[%s4 + $0x40] sm:$0xff]
        %v345 = vld [vmem:[%s4 + $0x48] sm:$0xff]
        %v346 = vld [vmem:[%s4 + $0x50] sm:$0xff]
        %v347 = vld [vmem:[%s4 + $0x58] sm:$0xff]
        %v348 = vld [vmem:[%s4 + $0x60] sm:$0xff]
        %v351 = vcombine.high %v321, %v321
        %v352 = vcombine.high %v322, %v322
        %vm353 = vcmask 31744
        %v355 = vsel %vm353, %v336, 0
        %v358 = vsel %vm353, %v337, 0
        %v361 = vsel %vm353, %v338, 0
        %v364 = vsel %vm353, %v339, 0
        %v367 = vsel %vm353, %v340, 0
        %v370 = vsel %vm353, %v341, 0
        %v373 = vsel %vm353, %v342, 0
        %v376 = vsel %vm353, %v343, 0
        %v379 = vsel %vm353, %v344, 0
        %v382 = vsel %vm353, %v345, 0
        %v385 = vsel %vm353, %v346, 0
        %v388 = vsel %vm353, %v347, 0
        %v391 = vsel %vm353, %v348, 0
        %vm393 = vcmask 1043456
        %v394 = vsel %vm393, %v321, 0
        %v396 = vsel %vm393, %v351, 0
        %v398 = vsel %vm393, %v322, 0
        %v400 = vsel %vm393, %v352, 0
        %402 = vmatprep.subr.mxu0 %v396
        %403 = vmatpush1.msra.mxu0 %v394
        %404 = vmatprep.subr.mxu0 0.0
        %405 = vmatpush1.msra.mxu0 0.0
        %406 = vmatprep.subr.mxu0 0.0
        %407 = vmatpush1.msra.mxu0 0.0
        %408 = vmatprep.subr.mxu0 0.0
        %409 = vmatpush1.msra.mxu0 0.0
        %410 = vmatprep.subr.mxu0 0.0
        %411 = vmatpush1.msra.mxu0 0.0
        %412 = vmatprep.subr.mxu0 0.0
        %413 = vmatpush1.msra.mxu0 0.0
        %414 = vmatprep.subr.mxu0 0.0
        %415 = vmatpush1.msra.mxu0 0.0
        %416 = vmatprep.subr.mxu0 0.0
        %417 = vmatpush1.msra.mxu0 0.0
        %418 = vmatprep.subr.mxu0 0.0
        %419 = vmatpush1.msra.mxu0 0.0
        %420 = vmatprep.subr.mxu0 0.0
        %421 = vmatpush1.msra.mxu0 0.0
        %422 = vmatprep.subr.mxu0 0.0
        %423 = vmatpush1.msra.mxu0 0.0
        %424 = vmatprep.subr.mxu0 0.0
        %425 = vmatpush1.msra.mxu0 0.0
        %426 = vmatprep.subr.mxu0 0.0
        %427 = vmatpush1.msra.mxu0 0.0
        %428 = vmatprep.subr.mxu0 0.0
        %429 = vmatpush1.msra.mxu0 0.0
        %430 = vmatprep.subr.mxu0 0.0
        %431 = vmatpush1.msra.mxu0 0.0
        %432 = vmatprep.subr.mxu0 0.0
        %433 = vmatpush1.msra.mxu0 0.0
        %434 = vmatprep.subr.mxu0 0.0
        %435 = vmatpush1.msra.mxu0 0.0
        %436 = vmatprep.subr.mxu0 0.0
        %437 = vmatpush1.msra.mxu0 0.0
        %438 = vmatprep.subr.mxu0 0.0
        %439 = vmatpush1.msra.mxu0 0.0
        %440 = vmatprep.subr.mxu0 0.0
        %441 = vmatpush1.msra.mxu0 0.0
        %442 = vmatprep.subr.mxu0 0.0
        %443 = vmatpush1.msra.mxu0 0.0
        %444 = vmatprep.subr.mxu0 0.0
        %445 = vmatpush1.msra.mxu0 0.0
        %446 = vmatprep.subr.mxu0 0.0
        %447 = vmatpush1.msra.mxu0 0.0
        %448 = vmatprep.subr.mxu0 0.0
        %449 = vmatpush1.msra.mxu0 0.0
        %450 = vmatprep.subr.mxu0 0.0
        %451 = vmatpush1.msra.mxu0 0.0
        %452 = vmatprep.subr.mxu0 0.0
        %453 = vmatpush1.msra.mxu0 0.0
        %454 = vmatprep.subr.mxu0 0.0
        %455 = vmatpush1.msra.mxu0 0.0
        %456 = vmatprep.subr.mxu0 0.0
        %457 = vmatpush1.msra.mxu0 0.0
        %458 = vmatprep.subr.mxu0 0.0
        %459 = vmatpush1.msra.mxu0 0.0
        %460 = vmatprep.subr.mxu0 0.0
        %461 = vmatpush1.msra.mxu0 0.0
        %462 = vmatprep.subr.mxu0 0.0
        %463 = vmatpush1.msra.mxu0 0.0
        %464 = vmatprep.subr.mxu0 0.0
        %465 = vmatpush1.msra.mxu0 0.0
        %466 = vmatprep.mubr.f32.mxu0 0.0
        %467 = vmatmul.mubr.f32.gmra.mrb[0].mxu0 %v355
        %v468 = vpop.f32.mrb[0].mxu0
        %v469 = vadd.f32 0.0, %v468
        %v470 = vpop.f32.mrb[0].mxu0
        %v471 = vadd.f32 0.0, %v470
        %472 = vmatprep.mubr.f32.mxu0 0.0
        %473 = vmatmul.mubr.f32.gmra.mrb[0].mxu0 %v358
        %v474 = vpop.f32.mrb[0].mxu0
        %v475 = vadd.f32 0.0, %v474
        %v476 = vpop.f32.mrb[0].mxu0
        %v477 = vadd.f32 0.0, %v476
        %478 = vmatprep.mubr.f32.mxu0 0.0
        %479 = vmatmul.mubr.f32.gmra.mrb[0].mxu0 %v361
        %v480 = vpop.f32.mrb[0].mxu0
        %v481 = vadd.f32 0.0, %v480
        %v482 = vpop.f32.mrb[0].mxu0
        %v483 = vadd.f32 0.0, %v482
        %484 = vmatprep.mubr.f32.mxu0 0.0
        %485 = vmatmul.mubr.f32.gmra.mrb[0].mxu0 %v364
        %v486 = vpop.f32.mrb[0].mxu0
        %v487 = vadd.f32 0.0, %v486
        %v488 = vpop.f32.mrb[0].mxu0
        %v489 = vadd.f32 0.0, %v488
        %490 = vmatprep.mubr.f32.mxu0 0.0
        %491 = vmatmul.mubr.f32.gmra.mrb[0].mxu0 %v367
        %v492 = vpop.f32.mrb[0].mxu0
        %v493 = vadd.f32 0.0, %v492
        %v494 = vpop.f32.mrb[0].mxu0
        %v495 = vadd.f32 0.0, %v494
        %496 = vmatprep.mubr.f32.mxu0 0.0
        %497 = vmatmul.mubr.f32.gmra.mrb[0].mxu0 %v370
        %v498 = vpop.f32.mrb[0].mxu0
        %v499 = vadd.f32 0.0, %v498
        %v500 = vpop.f32.mrb[0].mxu0
        %v501 = vadd.f32 0.0, %v500
        %502 = vmatprep.mubr.f32.mxu0 0.0
        %503 = vmatmul.mubr.f32.gmra.mrb[0].mxu0 %v373
        %v504 = vpop.f32.mrb[0].mxu0
        %v505 = vadd.f32 0.0, %v504
        %v506 = vpop.f32.mrb[0].mxu0
        %v507 = vadd.f32 0.0, %v506
        %508 = vmatprep.mubr.f32.mxu0 0.0
        %509 = vmatmul.mubr.f32.gmra.mrb[0].mxu0 %v376
        %v510 = vpop.f32.mrb[0].mxu0
        %v511 = vadd.f32 0.0, %v510
        %v512 = vpop.f32.mrb[0].mxu0
        %v513 = vadd.f32 0.0, %v512
        %514 = vmatprep.mubr.f32.mxu0 0.0
        %515 = vmatmul.mubr.f32.gmra.mrb[0].mxu0 %v379
        %v516 = vpop.f32.mrb[0].mxu0
        %v517 = vadd.f32 0.0, %v516
        %v518 = vpop.f32.mrb[0].mxu0
        %v519 = vadd.f32 0.0, %v518
        %520 = vmatprep.mubr.f32.mxu0 0.0
        %521 = vmatmul.mubr.f32.gmra.mrb[0].mxu0 %v382
        %v522 = vpop.f32.mrb[0].mxu0
        %v523 = vadd.f32 0.0, %v522
        %v524 = vpop.f32.mrb[0].mxu0
        %v525 = vadd.f32 0.0, %v524
        %526 = vmatprep.mubr.f32.mxu0 0.0
        %527 = vmatmul.mubr.f32.gmra.mrb[0].mxu0 %v385
        %v528 = vpop.f32.mrb[0].mxu0
        %v529 = vadd.f32 0.0, %v528
        %v530 = vpop.f32.mrb[0].mxu0
        %v531 = vadd.f32 0.0, %v530
        %532 = vmatprep.mubr.f32.mxu0 0.0
        %533 = vmatmul.mubr.f32.gmra.mrb[0].mxu0 %v388
        %v534 = vpop.f32.mrb[0].mxu0
        %v535 = vadd.f32 0.0, %v534
        %v536 = vpop.f32.mrb[0].mxu0
        %v537 = vadd.f32 0.0, %v536
        %538 = vmatprep.mubr.f32.mxu0 0.0
        %539 = vmatmul.mubr.f32.gmra.mrb[0].mxu0 %v391
        %v540 = vpop.f32.mrb[0].mxu0
        %v541 = vadd.f32 0.0, %v540
        %v542 = vpop.f32.mrb[0].mxu0
        %v543 = vadd.f32 0.0, %v542
        %544 = vdwg.mxu0
        %545 = vmatprep.subr.mxu0 %v400
        %546 = vmatpush1.msra.mxu0 %v398
        %547 = vmatprep.subr.mxu0 0.0
        %548 = vmatpush1.msra.mxu0 0.0
        %549 = vmatprep.subr.mxu0 0.0
        %550 = vmatpush1.msra.mxu0 0.0
        %551 = vmatprep.subr.mxu0 0.0
        %552 = vmatpush1.msra.mxu0 0.0
        %553 = vmatprep.subr.mxu0 0.0
        %554 = vmatpush1.msra.mxu0 0.0
        %555 = vmatprep.subr.mxu0 0.0
        %556 = vmatpush1.msra.mxu0 0.0
        %557 = vmatprep.subr.mxu0 0.0
        %558 = vmatpush1.msra.mxu0 0.0
        %559 = vmatprep.subr.mxu0 0.0
        %560 = vmatpush1.msra.mxu0 0.0
        %561 = vmatprep.subr.mxu0 0.0
        %562 = vmatpush1.msra.mxu0 0.0
        %563 = vmatprep.subr.mxu0 0.0
        %564 = vmatpush1.msra.mxu0 0.0
        %565 = vmatprep.subr.mxu0 0.0
        %566 = vmatpush1.msra.mxu0 0.0
        %567 = vmatprep.subr.mxu0 0.0
        %568 = vmatpush1.msra.mxu0 0.0
        %569 = vmatprep.subr.mxu0 0.0
        %570 = vmatpush1.msra.mxu0 0.0
        %571 = vmatprep.subr.mxu0 0.0
        %572 = vmatpush1.msra.mxu0 0.0
        %573 = vmatprep.subr.mxu0 0.0
        %574 = vmatpush1.msra.mxu0 0.0
        %575 = vmatprep.subr.mxu0 0.0
        %576 = vmatpush1.msra.mxu0 0.0
        %577 = vmatprep.subr.mxu0 0.0
        %578 = vmatpush1.msra.mxu0 0.0
        %579 = vmatprep.subr.mxu0 0.0
        %580 = vmatpush1.msra.mxu0 0.0
        %581 = vmatprep.subr.mxu0 0.0
        %582 = vmatpush1.msra.mxu0 0.0
        %583 = vmatprep.subr.mxu0 0.0
        %584 = vmatpush1.msra.mxu0 0.0
        %585 = vmatprep.subr.mxu0 0.0
        %586 = vmatpush1.msra.mxu0 0.0
        %587 = vmatprep.subr.mxu0 0.0
        %588 = vmatpush1.msra.mxu0 0.0
        %589 = vmatprep.subr.mxu0 0.0
        %590 = vmatpush1.msra.mxu0 0.0
        %591 = vmatprep.subr.mxu0 0.0
        %592 = vmatpush1.msra.mxu0 0.0
        %593 = vmatprep.subr.mxu0 0.0
        %594 = vmatpush1.msra.mxu0 0.0
        %595 = vmatprep.subr.mxu0 0.0
        %596 = vmatpush1.msra.mxu0 0.0
        %597 = vmatprep.subr.mxu0 0.0
        %598 = vmatpush1.msra.mxu0 0.0
        %599 = vmatprep.subr.mxu0 0.0
        %600 = vmatpush1.msra.mxu0 0.0
        %601 = vmatprep.subr.mxu0 0.0
        %602 = vmatpush1.msra.mxu0 0.0
        %603 = vmatprep.subr.mxu0 0.0
        %604 = vmatpush1.msra.mxu0 0.0
        %605 = vmatprep.subr.mxu0 0.0
        %606 = vmatpush1.msra.mxu0 0.0
        %607 = vmatprep.subr.mxu0 0.0
        %608 = vmatpush1.msra.mxu0 0.0
        %609 = vmatprep.mubr.f32.mxu0 0.0
        %610 = vmatmul.mubr.f32.gmra.mrb[0].mxu0 %v355
        %v611 = vpop.f32.mrb[0].mxu0
        %v612 = vadd.f32 0.0, %v611
        %v613 = vpop.f32.mrb[0].mxu0
        %v614 = vadd.f32 0.0, %v613
        %615 = vmatprep.mubr.f32.mxu0 0.0
        %616 = vmatmul.mubr.f32.gmra.mrb[0].mxu0 %v358
        %v617 = vpop.f32.mrb[0].mxu0
        %v618 = vadd.f32 0.0, %v617
        %v619 = vpop.f32.mrb[0].mxu0
        %v620 = vadd.f32 0.0, %v619
        %621 = vmatprep.mubr.f32.mxu0 0.0
        %622 = vmatmul.mubr.f32.gmra.mrb[0].mxu0 %v361
        %v623 = vpop.f32.mrb[0].mxu0
        %v624 = vadd.f32 0.0, %v623
        %v625 = vpop.f32.mrb[0].mxu0
        %v626 = vadd.f32 0.0, %v625
        %627 = vmatprep.mubr.f32.mxu0 0.0
        %628 = vmatmul.mubr.f32.gmra.mrb[0].mxu0 %v364
        %v629 = vpop.f32.mrb[0].mxu0
        %v630 = vadd.f32 0.0, %v629
        %v631 = vpop.f32.mrb[0].mxu0
        %v632 = vadd.f32 0.0, %v631
        %633 = vmatprep.mubr.f32.mxu0 0.0
        %634 = vmatmul.mubr.f32.gmra.mrb[0].mxu0 %v367
        %v635 = vpop.f32.mrb[0].mxu0
        %v636 = vadd.f32 0.0, %v635
        %v637 = vpop.f32.mrb[0].mxu0
        %v638 = vadd.f32 0.0, %v637
        %639 = vmatprep.mubr.f32.mxu0 0.0
        %640 = vmatmul.mubr.f32.gmra.mrb[0].mxu0 %v370
        %v641 = vpop.f32.mrb[0].mxu0
        %v642 = vadd.f32 0.0, %v641
        %v643 = vpop.f32.mrb[0].mxu0
        %v644 = vadd.f32 0.0, %v643
        %645 = vmatprep.mubr.f32.mxu0 0.0
        %646 = vmatmul.mubr.f32.gmra.mrb[0].mxu0 %v373
        %v647 = vpop.f32.mrb[0].mxu0
        %v648 = vadd.f32 0.0, %v647
        %v649 = vpop.f32.mrb[0].mxu0
        %v650 = vadd.f32 0.0, %v649
        %651 = vmatprep.mubr.f32.mxu0 0.0
        %652 = vmatmul.mubr.f32.gmra.mrb[0].mxu0 %v376
        %v653 = vpop.f32.mrb[0].mxu0
        %v654 = vadd.f32 0.0, %v653
        %v655 = vpop.f32.mrb[0].mxu0
        %v656 = vadd.f32 0.0, %v655
        %657 = vmatprep.mubr.f32.mxu0 0.0
        %658 = vmatmul.mubr.f32.gmra.mrb[0].mxu0 %v379
        %v659 = vpop.f32.mrb[0].mxu0
        %v660 = vadd.f32 0.0, %v659
        %v661 = vpop.f32.mrb[0].mxu0
        %v662 = vadd.f32 0.0, %v661
        %663 = vmatprep.mubr.f32.mxu0 0.0
        %664 = vmatmul.mubr.f32.gmra.mrb[0].mxu0 %v382
        %v665 = vpop.f32.mrb[0].mxu0
        %v666 = vadd.f32 0.0, %v665
        %v667 = vpop.f32.mrb[0].mxu0
        %v668 = vadd.f32 0.0, %v667
        %669 = vmatprep.mubr.f32.mxu0 0.0
        %670 = vmatmul.mubr.f32.gmra.mrb[0].mxu0 %v385
        %v671 = vpop.f32.mrb[0].mxu0
        %v672 = vadd.f32 0.0, %v671
        %v673 = vpop.f32.mrb[0].mxu0
        %v674 = vadd.f32 0.0, %v673
        %675 = vmatprep.mubr.f32.mxu0 0.0
        %676 = vmatmul.mubr.f32.gmra.mrb[0].mxu0 %v388
        %v677 = vpop.f32.mrb[0].mxu0
        %v678 = vadd.f32 0.0, %v677
        %v679 = vpop.f32.mrb[0].mxu0
        %v680 = vadd.f32 0.0, %v679
        %681 = vmatprep.mubr.f32.mxu0 0.0
        %682 = vmatmul.mubr.f32.gmra.mrb[0].mxu0 %v391
        %v683 = vpop.f32.mrb[0].mxu0
        %v684 = vadd.f32 0.0, %v683
        %v685 = vpop.f32.mrb[0].mxu0
        %v686 = vadd.f32 0.0, %v685
        %687 = vdwg.mxu0
        %v688 = vld [vmem:[%s2] sm:$0xff]
        %v689 = vld [vmem:[%s2 + $0x8] sm:$0xff]
        %v690 = vld [vmem:[%s2 + $0x10] sm:$0xff]
        %v691 = vld [vmem:[%s2 + $0x18] sm:$0xff]
        %vm692 = vcmask 64512
        %v694 = vsel %vm692, %v688, 0
        %v697 = vsel %vm692, %v689, 0
        %v700 = vsel %vm692, %v690, 0
        %v703 = vsel %vm692, %v691, 0
        %705 = vmatprep.subr.mxu0 %v318
        %706 = vmatpush1.msra.mxu0 %v317
        %707 = vmatprep.subr.mxu0 0.0
        %708 = vmatpush1.msra.mxu0 0.0
        %709 = vmatprep.subr.mxu0 0.0
        %710 = vmatpush1.msra.mxu0 0.0
        %711 = vmatprep.subr.mxu0 0.0
        %712 = vmatpush1.msra.mxu0 0.0
        %713 = vmatprep.subr.mxu0 0.0
        %714 = vmatpush1.msra.mxu0 0.0
        %715 = vmatprep.subr.mxu0 0.0
        %716 = vmatpush1.msra.mxu0 0.0
        %717 = vmatprep.subr.mxu0 0.0
        %718 = vmatpush1.msra.mxu0 0.0
        %719 = vmatprep.subr.mxu0 0.0
        %720 = vmatpush1.msra.mxu0 0.0
        %721 = vmatprep.subr.mxu0 0.0
        %722 = vmatpush1.msra.mxu0 0.0
        %723 = vmatprep.subr.mxu0 0.0
        %724 = vmatpush1.msra.mxu0 0.0
        %725 = vmatprep.subr.mxu0 0.0
        %726 = vmatpush1.msra.mxu0 0.0
        %727 = vmatprep.subr.mxu0 0.0
        %728 = vmatpush1.msra.mxu0 0.0
        %729 = vmatprep.subr.mxu0 0.0
        %730 = vmatpush1.msra.mxu0 0.0
        %731 = vmatprep.subr.mxu0 0.0
        %732 = vmatpush1.msra.mxu0 0.0
        %733 = vmatprep.subr.mxu0 0.0
        %734 = vmatpush1.msra.mxu0 0.0
        %735 = vmatprep.subr.mxu0 0.0
        %736 = vmatpush1.msra.mxu0 0.0
        %737 = vmatprep.subr.mxu0 0.0
        %738 = vmatpush1.msra.mxu0 0.0
        %739 = vmatprep.subr.mxu0 0.0
        %740 = vmatpush1.msra.mxu0 0.0
        %741 = vmatprep.subr.mxu0 0.0
        %742 = vmatpush1.msra.mxu0 0.0
        %743 = vmatprep.subr.mxu0 0.0
        %744 = vmatpush1.msra.mxu0 0.0
        %745 = vmatprep.subr.mxu0 0.0
        %746 = vmatpush1.msra.mxu0 0.0
        %747 = vmatprep.subr.mxu0 0.0
        %748 = vmatpush1.msra.mxu0 0.0
        %749 = vmatprep.subr.mxu0 0.0
        %750 = vmatpush1.msra.mxu0 0.0
        %751 = vmatprep.subr.mxu0 0.0
        %752 = vmatpush1.msra.mxu0 0.0
        %753 = vmatprep.subr.mxu0 0.0
        %754 = vmatpush1.msra.mxu0 0.0
        %755 = vmatprep.subr.mxu0 0.0
        %756 = vmatpush1.msra.mxu0 0.0
        %757 = vmatprep.subr.mxu0 0.0
        %758 = vmatpush1.msra.mxu0 0.0
        %759 = vmatprep.subr.mxu0 0.0
        %760 = vmatpush1.msra.mxu0 0.0
        %761 = vmatprep.subr.mxu0 0.0
        %762 = vmatpush1.msra.mxu0 0.0
        %763 = vmatprep.subr.mxu0 0.0
        %764 = vmatpush1.msra.mxu0 0.0
        %765 = vmatprep.subr.mxu0 0.0
        %766 = vmatpush1.msra.mxu0 0.0
        %767 = vmatprep.subr.mxu0 0.0
        %768 = vmatpush1.msra.mxu0 0.0
        %769 = vmatprep.mubr.f32.mxu0 0.0
        %770 = vmatmul.mubr.f32.gmra.mrb[0].mxu0 %v694
        %v771 = vpop.f32.mrb[0].mxu0
        %v772 = vadd.f32 %v469, %v771
        %v773 = vpop.f32.mrb[0].mxu0
        %v774 = vadd.f32 %v471, %v773
        %775 = vmatprep.mubr.f32.mxu0 0.0
        %776 = vmatmul.mubr.f32.gmra.mrb[0].mxu0 %v697
        %v777 = vpop.f32.mrb[0].mxu0
        %v778 = vadd.f32 %v475, %v777
        %v779 = vpop.f32.mrb[0].mxu0
        %v780 = vadd.f32 %v477, %v779
        %781 = vmatprep.mubr.f32.mxu0 0.0
        %782 = vmatmul.mubr.f32.gmra.mrb[0].mxu0 %v700
        %v783 = vpop.f32.mrb[0].mxu0
        %v784 = vadd.f32 %v481, %v783
        %v785 = vpop.f32.mrb[0].mxu0
        %v786 = vadd.f32 %v483, %v785
        %787 = vmatprep.mubr.f32.mxu0 0.0
        %788 = vmatmul.mubr.f32.gmra.mrb[0].mxu0 %v703
        %v789 = vpop.f32.mrb[0].mxu0
        %v790 = vadd.f32 %v487, %v789
        %v791 = vpop.f32.mrb[0].mxu0
        %v792 = vadd.f32 %v489, %v791
        %793 = vdwg.mxu0
        %794 = vmatprep.subr.mxu0 %v320
        %795 = vmatpush1.msra.mxu0 %v319
        %796 = vmatprep.subr.mxu0 0.0
        %797 = vmatpush1.msra.mxu0 0.0
        %798 = vmatprep.subr.mxu0 0.0
        %799 = vmatpush1.msra.mxu0 0.0
        %800 = vmatprep.subr.mxu0 0.0
        %801 = vmatpush1.msra.mxu0 0.0
        %802 = vmatprep.subr.mxu0 0.0
        %803 = vmatpush1.msra.mxu0 0.0
        %804 = vmatprep.subr.mxu0 0.0
        %805 = vmatpush1.msra.mxu0 0.0
        %806 = vmatprep.subr.mxu0 0.0
        %807 = vmatpush1.msra.mxu0 0.0
        %808 = vmatprep.subr.mxu0 0.0
        %809 = vmatpush1.msra.mxu0 0.0
        %810 = vmatprep.subr.mxu0 0.0
        %811 = vmatpush1.msra.mxu0 0.0
        %812 = vmatprep.subr.mxu0 0.0
        %813 = vmatpush1.msra.mxu0 0.0
        %814 = vmatprep.subr.mxu0 0.0
        %815 = vmatpush1.msra.mxu0 0.0
        %816 = vmatprep.subr.mxu0 0.0
        %817 = vmatpush1.msra.mxu0 0.0
        %818 = vmatprep.subr.mxu0 0.0
        %819 = vmatpush1.msra.mxu0 0.0
        %820 = vmatprep.subr.mxu0 0.0
        %821 = vmatpush1.msra.mxu0 0.0
        %822 = vmatprep.subr.mxu0 0.0
        %823 = vmatpush1.msra.mxu0 0.0
        %824 = vmatprep.subr.mxu0 0.0
        %825 = vmatpush1.msra.mxu0 0.0
        %826 = vmatprep.subr.mxu0 0.0
        %827 = vmatpush1.msra.mxu0 0.0
        %828 = vmatprep.subr.mxu0 0.0
        %829 = vmatpush1.msra.mxu0 0.0
        %830 = vmatprep.subr.mxu0 0.0
        %831 = vmatpush1.msra.mxu0 0.0
        %832 = vmatprep.subr.mxu0 0.0
        %833 = vmatpush1.msra.mxu0 0.0
        %834 = vmatprep.subr.mxu0 0.0
        %835 = vmatpush1.msra.mxu0 0.0
        %836 = vmatprep.subr.mxu0 0.0
        %837 = vmatpush1.msra.mxu0 0.0
        %838 = vmatprep.subr.mxu0 0.0
        %839 = vmatpush1.msra.mxu0 0.0
        %840 = vmatprep.subr.mxu0 0.0
        %841 = vmatpush1.msra.mxu0 0.0
        %842 = vmatprep.subr.mxu0 0.0
        %843 = vmatpush1.msra.mxu0 0.0
        %844 = vmatprep.subr.mxu0 0.0
        %845 = vmatpush1.msra.mxu0 0.0
        %846 = vmatprep.subr.mxu0 0.0
        %847 = vmatpush1.msra.mxu0 0.0
        %848 = vmatprep.subr.mxu0 0.0
        %849 = vmatpush1.msra.mxu0 0.0
        %850 = vmatprep.subr.mxu0 0.0
        %851 = vmatpush1.msra.mxu0 0.0
        %852 = vmatprep.subr.mxu0 0.0
        %853 = vmatpush1.msra.mxu0 0.0
        %854 = vmatprep.subr.mxu0 0.0
        %855 = vmatpush1.msra.mxu0 0.0
        %856 = vmatprep.subr.mxu0 0.0
        %857 = vmatpush1.msra.mxu0 0.0
        %858 = vmatprep.mubr.f32.mxu0 0.0
        %859 = vmatmul.mubr.f32.gmra.mrb[0].mxu0 %v694
        %v860 = vpop.f32.mrb[0].mxu0
        %v861 = vadd.f32 %v612, %v860
        %v862 = vpop.f32.mrb[0].mxu0
        %v863 = vadd.f32 %v614, %v862
        %864 = vmatprep.mubr.f32.mxu0 0.0
        %865 = vmatmul.mubr.f32.gmra.mrb[0].mxu0 %v697
        %v866 = vpop.f32.mrb[0].mxu0
        %v867 = vadd.f32 %v618, %v866
        %v868 = vpop.f32.mrb[0].mxu0
        %v869 = vadd.f32 %v620, %v868
        %870 = vmatprep.mubr.f32.mxu0 0.0
        %871 = vmatmul.mubr.f32.gmra.mrb[0].mxu0 %v700
        %v872 = vpop.f32.mrb[0].mxu0
        %v873 = vadd.f32 %v624, %v872
        %v874 = vpop.f32.mrb[0].mxu0
        %v875 = vadd.f32 %v626, %v874
        %876 = vmatprep.mubr.f32.mxu0 0.0
        %877 = vmatmul.mubr.f32.gmra.mrb[0].mxu0 %v703
        %v878 = vpop.f32.mrb[0].mxu0
        %v879 = vadd.f32 %v630, %v878
        %v880 = vpop.f32.mrb[0].mxu0
        %v881 = vadd.f32 %v632, %v880
        %882 = vdwg.mxu0
        %884 = vset.pattern.permute.xlu0 0
        %885 = vperm.xlu0 %884, %v323
        %v886 = vpop.permute.xlu0 %885
        %889 = vset.pattern.permute.xlu0 0
        %890 = vperm.xlu0 %889, %v324
        %v891 = vpop.permute.xlu0 %890
        %894 = vset.pattern.permute.xlu0 0
        %895 = vperm.xlu0 %894, %v325
        %v896 = vpop.permute.xlu0 %895
        %899 = vset.pattern.permute.xlu0 0
        %900 = vperm.xlu0 %899, %v326
        %v901 = vpop.permute.xlu0 %900
        %v903 = vadd.f32 %v772, %v886
        %v904 = vadd.f32 %v774, %v886
        %v905 = vadd.f32 %v861, %v886
        %v906 = vadd.f32 %v863, %v886
        %v907 = vadd.f32 %v778, %v891
        %v908 = vadd.f32 %v780, %v891
        %v909 = vadd.f32 %v867, %v891
        %v910 = vadd.f32 %v869, %v891
        %v911 = vadd.f32 %v784, %v896
        %v912 = vadd.f32 %v786, %v896
        %v913 = vadd.f32 %v873, %v896
        %v914 = vadd.f32 %v875, %v896
        %v915 = vadd.f32 %v790, %v901
        %v916 = vadd.f32 %v792, %v901
        %v917 = vadd.f32 %v879, %v901
        %v918 = vadd.f32 %v881, %v901
        %v919 = vmax.f32 %v903, 0.0
        %v920 = vmax.f32 %v904, 0.0
        %v921 = vmax.f32 %v905, 0.0
        %v922 = vmax.f32 %v906, 0.0
        %v923 = vmax.f32 %v907, 0.0
        %v924 = vmax.f32 %v908, 0.0
        %v925 = vmax.f32 %v909, 0.0
        %v926 = vmax.f32 %v910, 0.0
        %v927 = vmax.f32 %v911, 0.0
        %v928 = vmax.f32 %v912, 0.0
        %v929 = vmax.f32 %v913, 0.0
        %v930 = vmax.f32 %v914, 0.0
        %v931 = vmax.f32 %v915, 0.0
        %v932 = vmax.f32 %v916, 0.0
        %v933 = vmax.f32 %v917, 0.0
        %v934 = vmax.f32 %v918, 0.0
        %v935 = vld [vmem:[%s3] sm:$0xff]
        %v936 = vld [vmem:[%s3 + $0x8] sm:$0xff]
        %v937 = vld [vmem:[%s3 + $0x10] sm:$0xff]
        %v938 = vld [vmem:[%s3 + $0x18] sm:$0xff]
        %vm939 = vcmask 261120
        %v941 = vsel %vm939, %v935, 0
        %v944 = vsel %vm939, %v936, 0
        %v947 = vsel %vm939, %v937, 0
        %v950 = vsel %vm939, %v938, 0
        %952 = vmatprep.subr.mxu0 %v920
        %953 = vmatpush1.msra.mxu0 %v919
        %954 = vmatprep.subr.mxu0 %v924
        %955 = vmatpush1.msra.mxu0 %v923
        %956 = vmatprep.subr.mxu0 %v928
        %957 = vmatpush1.msra.mxu0 %v927
        %958 = vmatprep.subr.mxu0 %v932
        %959 = vmatpush1.msra.mxu0 %v931
        %960 = vmatprep.subr.mxu0 0.0
        %961 = vmatpush1.msra.mxu0 0.0
        %962 = vmatprep.subr.mxu0 0.0
        %963 = vmatpush1.msra.mxu0 0.0
        %964 = vmatprep.subr.mxu0 0.0
        %965 = vmatpush1.msra.mxu0 0.0
        %966 = vmatprep.subr.mxu0 0.0
        %967 = vmatpush1.msra.mxu0 0.0
        %968 = vmatprep.subr.mxu0 0.0
        %969 = vmatpush1.msra.mxu0 0.0
        %970 = vmatprep.subr.mxu0 0.0
        %971 = vmatpush1.msra.mxu0 0.0
        %972 = vmatprep.subr.mxu0 0.0
        %973 = vmatpush1.msra.mxu0 0.0
        %974 = vmatprep.subr.mxu0 0.0
        %975 = vmatpush1.msra.mxu0 0.0
        %976 = vmatprep.subr.mxu0 0.0
        %977 = vmatpush1.msra.mxu0 0.0
        %978 = vmatprep.subr.mxu0 0.0
        %979 = vmatpush1.msra.mxu0 0.0
        %980 = vmatprep.subr.mxu0 0.0
        %981 = vmatpush1.msra.mxu0 0.0
        %982 = vmatprep.subr.mxu0 0.0
        %983 = vmatpush1.msra.mxu0 0.0
        %984 = vmatprep.subr.mxu0 0.0
        %985 = vmatpush1.msra.mxu0 0.0
        %986 = vmatprep.subr.mxu0 0.0
        %987 = vmatpush1.msra.mxu0 0.0
        %988 = vmatprep.subr.mxu0 0.0
        %989 = vmatpush1.msra.mxu0 0.0
        %990 = vmatprep.subr.mxu0 0.0
        %991 = vmatpush1.msra.mxu0 0.0
        %992 = vmatprep.subr.mxu0 0.0
        %993 = vmatpush1.msra.mxu0 0.0
        %994 = vmatprep.subr.mxu0 0.0
        %995 = vmatpush1.msra.mxu0 0.0
        %996 = vmatprep.subr.mxu0 0.0
        %997 = vmatpush1.msra.mxu0 0.0
        %998 = vmatprep.subr.mxu0 0.0
        %999 = vmatpush1.msra.mxu0 0.0
        %1000 = vmatprep.subr.mxu0 0.0
        %1001 = vmatpush1.msra.mxu0 0.0
        %1002 = vmatprep.subr.mxu0 0.0
        %1003 = vmatpush1.msra.mxu0 0.0
        %1004 = vmatprep.subr.mxu0 0.0
        %1005 = vmatpush1.msra.mxu0 0.0
        %1006 = vmatprep.subr.mxu0 0.0
        %1007 = vmatpush1.msra.mxu0 0.0
        %1008 = vmatprep.subr.mxu0 0.0
        %1009 = vmatpush1.msra.mxu0 0.0
        %1010 = vmatprep.subr.mxu0 0.0
        %1011 = vmatpush1.msra.mxu0 0.0
        %1012 = vmatprep.subr.mxu0 0.0
        %1013 = vmatpush1.msra.mxu0 0.0
        %1014 = vmatprep.subr.mxu0 0.0
        %1015 = vmatpush1.msra.mxu0 0.0
        %1016 = vmatprep.mubr.f32.mxu0 0.0
        %1017 = vmatmul.mubr.f32.gmra.mrb[0].mxu0 %v941
        %v1018 = vpop.f32.mrb[0].mxu0
        %v1019 = vadd.f32 %v493, %v1018
        %v1020 = vpop.f32.mrb[0].mxu0
        %v1021 = vadd.f32 %v495, %v1020
        %1022 = vmatprep.mubr.f32.mxu0 0.0
        %1023 = vmatmul.mubr.f32.gmra.mrb[0].mxu0 %v944
        %v1024 = vpop.f32.mrb[0].mxu0
        %v1025 = vadd.f32 %v499, %v1024
        %v1026 = vpop.f32.mrb[0].mxu0
        %v1027 = vadd.f32 %v501, %v1026
        %1028 = vmatprep.mubr.f32.mxu0 0.0
        %1029 = vmatmul.mubr.f32.gmra.mrb[0].mxu0 %v947
        %v1030 = vpop.f32.mrb[0].mxu0
        %v1031 = vadd.f32 %v505, %v1030
        %v1032 = vpop.f32.mrb[0].mxu0
        %v1033 = vadd.f32 %v507, %v1032
        %1034 = vmatprep.mubr.f32.mxu0 0.0
        %1035 = vmatmul.mubr.f32.gmra.mrb[0].mxu0 %v950
        %v1036 = vpop.f32.mrb[0].mxu0
        %v1037 = vadd.f32 %v511, %v1036
        %v1038 = vpop.f32.mrb[0].mxu0
        %v1039 = vadd.f32 %v513, %v1038
        %1040 = vdwg.mxu0
        %1041 = vmatprep.subr.mxu0 %v922
        %1042 = vmatpush1.msra.mxu0 %v921
        %1043 = vmatprep.subr.mxu0 %v926
        %1044 = vmatpush1.msra.mxu0 %v925
        %1045 = vmatprep.subr.mxu0 %v930
        %1046 = vmatpush1.msra.mxu0 %v929
        %1047 = vmatprep.subr.mxu0 %v934
        %1048 = vmatpush1.msra.mxu0 %v933
        %1049 = vmatprep.subr.mxu0 0.0
        %1050 = vmatpush1.msra.mxu0 0.0
        %1051 = vmatprep.subr.mxu0 0.0
        %1052 = vmatpush1.msra.mxu0 0.0
        %1053 = vmatprep.subr.mxu0 0.0
        %1054 = vmatpush1.msra.mxu0 0.0
        %1055 = vmatprep.subr.mxu0 0.0
        %1056 = vmatpush1.msra.mxu0 0.0
        %1057 = vmatprep.subr.mxu0 0.0
        %1058 = vmatpush1.msra.mxu0 0.0
        %1059 = vmatprep.subr.mxu0 0.0
        %1060 = vmatpush1.msra.mxu0 0.0
        %1061 = vmatprep.subr.mxu0 0.0
        %1062 = vmatpush1.msra.mxu0 0.0
        %1063 = vmatprep.subr.mxu0 0.0
        %1064 = vmatpush1.msra.mxu0 0.0
        %1065 = vmatprep.subr.mxu0 0.0
        %1066 = vmatpush1.msra.mxu0 0.0
        %1067 = vmatprep.subr.mxu0 0.0
        %1068 = vmatpush1.msra.mxu0 0.0
        %1069 = vmatprep.subr.mxu0 0.0
        %1070 = vmatpush1.msra.mxu0 0.0
        %1071 = vmatprep.subr.mxu0 0.0
        %1072 = vmatpush1.msra.mxu0 0.0
        %1073 = vmatprep.subr.mxu0 0.0
        %1074 = vmatpush1.msra.mxu0 0.0
        %1075 = vmatprep.subr.mxu0 0.0
        %1076 = vmatpush1.msra.mxu0 0.0
        %1077 = vmatprep.subr.mxu0 0.0
        %1078 = vmatpush1.msra.mxu0 0.0
        %1079 = vmatprep.subr.mxu0 0.0
        %1080 = vmatpush1.msra.mxu0 0.0
        %1081 = vmatprep.subr.mxu0 0.0
        %1082 = vmatpush1.msra.mxu0 0.0
        %1083 = vmatprep.subr.mxu0 0.0
        %1084 = vmatpush1.msra.mxu0 0.0
        %1085 = vmatprep.subr.mxu0 0.0
        %1086 = vmatpush1.msra.mxu0 0.0
        %1087 = vmatprep.subr.mxu0 0.0
        %1088 = vmatpush1.msra.mxu0 0.0
        %1089 = vmatprep.subr.mxu0 0.0
        %1090 = vmatpush1.msra.mxu0 0.0
        %1091 = vmatprep.subr.mxu0 0.0
        %1092 = vmatpush1.msra.mxu0 0.0
        %1093 = vmatprep.subr.mxu0 0.0
        %1094 = vmatpush1.msra.mxu0 0.0
        %1095 = vmatprep.subr.mxu0 0.0
        %1096 = vmatpush1.msra.mxu0 0.0
        %1097 = vmatprep.subr.mxu0 0.0
        %1098 = vmatpush1.msra.mxu0 0.0
        %1099 = vmatprep.subr.mxu0 0.0
        %1100 = vmatpush1.msra.mxu0 0.0
        %1101 = vmatprep.subr.mxu0 0.0
        %1102 = vmatpush1.msra.mxu0 0.0
        %1103 = vmatprep.subr.mxu0 0.0
        %1104 = vmatpush1.msra.mxu0 0.0
        %1105 = vmatprep.mubr.f32.mxu0 0.0
        %1106 = vmatmul.mubr.f32.gmra.mrb[0].mxu0 %v941
        %v1107 = vpop.f32.mrb[0].mxu0
        %v1108 = vadd.f32 %v636, %v1107
        %v1109 = vpop.f32.mrb[0].mxu0
        %v1110 = vadd.f32 %v638, %v1109
        %1111 = vmatprep.mubr.f32.mxu0 0.0
        %1112 = vmatmul.mubr.f32.gmra.mrb[0].mxu0 %v944
        %v1113 = vpop.f32.mrb[0].mxu0
        %v1114 = vadd.f32 %v642, %v1113
        %v1115 = vpop.f32.mrb[0].mxu0
        %v1116 = vadd.f32 %v644, %v1115
        %1117 = vmatprep.mubr.f32.mxu0 0.0
        %1118 = vmatmul.mubr.f32.gmra.mrb[0].mxu0 %v947
        %v1119 = vpop.f32.mrb[0].mxu0
        %v1120 = vadd.f32 %v648, %v1119
        %v1121 = vpop.f32.mrb[0].mxu0
        %v1122 = vadd.f32 %v650, %v1121
        %1123 = vmatprep.mubr.f32.mxu0 0.0
        %1124 = vmatmul.mubr.f32.gmra.mrb[0].mxu0 %v950
        %v1125 = vpop.f32.mrb[0].mxu0
        %v1126 = vadd.f32 %v654, %v1125
        %v1127 = vpop.f32.mrb[0].mxu0
        %v1128 = vadd.f32 %v656, %v1127
        %1129 = vdwg.mxu0
        %1131 = vset.pattern.permute.xlu0 0
        %1132 = vperm.xlu0 %1131, %v327
        %v1133 = vpop.permute.xlu0 %1132
        %1136 = vset.pattern.permute.xlu0 0
        %1137 = vperm.xlu0 %1136, %v328
        %v1138 = vpop.permute.xlu0 %1137
        %1141 = vset.pattern.permute.xlu0 0
        %1142 = vperm.xlu0 %1141, %v329
        %v1143 = vpop.permute.xlu0 %1142
        %1146 = vset.pattern.permute.xlu0 0
        %1147 = vperm.xlu0 %1146, %v330
        %v1148 = vpop.permute.xlu0 %1147
        %v1150 = vadd.f32 %v1019, %v1133
        %v1151 = vadd.f32 %v1021, %v1133
        %v1152 = vadd.f32 %v1108, %v1133
        %v1153 = vadd.f32 %v1110, %v1133
        %v1154 = vadd.f32 %v1025, %v1138
        %v1155 = vadd.f32 %v1027, %v1138
        %v1156 = vadd.f32 %v1114, %v1138
        %v1157 = vadd.f32 %v1116, %v1138
        %v1158 = vadd.f32 %v1031, %v1143
        %v1159 = vadd.f32 %v1033, %v1143
        %v1160 = vadd.f32 %v1120, %v1143
        %v1161 = vadd.f32 %v1122, %v1143
        %v1162 = vadd.f32 %v1037, %v1148
        %v1163 = vadd.f32 %v1039, %v1148
        %v1164 = vadd.f32 %v1126, %v1148
        %v1165 = vadd.f32 %v1128, %v1148
        %v1166 = vmax.f32 %v1150, 0.0
        %v1167 = vmax.f32 %v1151, 0.0
        %v1168 = vmax.f32 %v1152, 0.0
        %v1169 = vmax.f32 %v1153, 0.0
        %v1170 = vmax.f32 %v1154, 0.0
        %v1171 = vmax.f32 %v1155, 0.0
        %v1172 = vmax.f32 %v1156, 0.0
        %v1173 = vmax.f32 %v1157, 0.0
        %v1174 = vmax.f32 %v1158, 0.0
        %v1175 = vmax.f32 %v1159, 0.0
        %v1176 = vmax.f32 %v1160, 0.0
        %v1177 = vmax.f32 %v1161, 0.0
        %v1178 = vmax.f32 %v1162, 0.0
        %v1179 = vmax.f32 %v1163, 0.0
        %v1180 = vmax.f32 %v1164, 0.0
        %v1181 = vmax.f32 %v1165, 0.0
        %v1182 = vld [vmem:[%s3 + $0x20] sm:$0xff]
        %v1183 = vld [vmem:[%s3 + $0x28] sm:$0xff]
        %v1184 = vld [vmem:[%s3 + $0x30] sm:$0xff]
        %v1185 = vld [vmem:[%s3 + $0x38] sm:$0xff]
        %v1187 = vsel %vm939, %v1182, 0
        %v1190 = vsel %vm939, %v1183, 0
        %v1193 = vsel %vm939, %v1184, 0
        %v1196 = vsel %vm939, %v1185, 0
        %1198 = vmatprep.subr.mxu0 %v1167
        %1199 = vmatpush1.msra.mxu0 %v1166
        %1200 = vmatprep.subr.mxu0 %v1171
        %1201 = vmatpush1.msra.mxu0 %v1170
        %1202 = vmatprep.subr.mxu0 %v1175
        %1203 = vmatpush1.msra.mxu0 %v1174
        %1204 = vmatprep.subr.mxu0 %v1179
        %1205 = vmatpush1.msra.mxu0 %v1178
        %1206 = vmatprep.subr.mxu0 0.0
        %1207 = vmatpush1.msra.mxu0 0.0
        %1208 = vmatprep.subr.mxu0 0.0
        %1209 = vmatpush1.msra.mxu0 0.0
        %1210 = vmatprep.subr.mxu0 0.0
        %1211 = vmatpush1.msra.mxu0 0.0
        %1212 = vmatprep.subr.mxu0 0.0
        %1213 = vmatpush1.msra.mxu0 0.0
        %1214 = vmatprep.subr.mxu0 0.0
        %1215 = vmatpush1.msra.mxu0 0.0
        %1216 = vmatprep.subr.mxu0 0.0
        %1217 = vmatpush1.msra.mxu0 0.0
        %1218 = vmatprep.subr.mxu0 0.0
        %1219 = vmatpush1.msra.mxu0 0.0
        %1220 = vmatprep.subr.mxu0 0.0
        %1221 = vmatpush1.msra.mxu0 0.0
        %1222 = vmatprep.subr.mxu0 0.0
        %1223 = vmatpush1.msra.mxu0 0.0
        %1224 = vmatprep.subr.mxu0 0.0
        %1225 = vmatpush1.msra.mxu0 0.0
        %1226 = vmatprep.subr.mxu0 0.0
        %1227 = vmatpush1.msra.mxu0 0.0
        %1228 = vmatprep.subr.mxu0 0.0
        %1229 = vmatpush1.msra.mxu0 0.0
        %1230 = vmatprep.subr.mxu0 0.0
        %1231 = vmatpush1.msra.mxu0 0.0
        %1232 = vmatprep.subr.mxu0 0.0
        %1233 = vmatpush1.msra.mxu0 0.0
        %1234 = vmatprep.subr.mxu0 0.0
        %1235 = vmatpush1.msra.mxu0 0.0
        %1236 = vmatprep.subr.mxu0 0.0
        %1237 = vmatpush1.msra.mxu0 0.0
        %1238 = vmatprep.subr.mxu0 0.0
        %1239 = vmatpush1.msra.mxu0 0.0
        %1240 = vmatprep.subr.mxu0 0.0
        %1241 = vmatpush1.msra.mxu0 0.0
        %1242 = vmatprep.subr.mxu0 0.0
        %1243 = vmatpush1.msra.mxu0 0.0
        %1244 = vmatprep.subr.mxu0 0.0
        %1245 = vmatpush1.msra.mxu0 0.0
        %1246 = vmatprep.subr.mxu0 0.0
        %1247 = vmatpush1.msra.mxu0 0.0
        %1248 = vmatprep.subr.mxu0 0.0
        %1249 = vmatpush1.msra.mxu0 0.0
        %1250 = vmatprep.subr.mxu0 0.0
        %1251 = vmatpush1.msra.mxu0 0.0
        %1252 = vmatprep.subr.mxu0 0.0
        %1253 = vmatpush1.msra.mxu0 0.0
        %1254 = vmatprep.subr.mxu0 0.0
        %1255 = vmatpush1.msra.mxu0 0.0
        %1256 = vmatprep.subr.mxu0 0.0
        %1257 = vmatpush1.msra.mxu0 0.0
        %1258 = vmatprep.subr.mxu0 0.0
        %1259 = vmatpush1.msra.mxu0 0.0
        %1260 = vmatprep.subr.mxu0 0.0
        %1261 = vmatpush1.msra.mxu0 0.0
        %1262 = vmatprep.mubr.f32.mxu0 0.0
        %1263 = vmatmul.mubr.f32.gmra.mrb[0].mxu0 %v1187
        %v1264 = vpop.f32.mrb[0].mxu0
        %v1265 = vadd.f32 %v517, %v1264
        %v1266 = vpop.f32.mrb[0].mxu0
        %v1267 = vadd.f32 %v519, %v1266
        %1268 = vmatprep.mubr.f32.mxu0 0.0
        %1269 = vmatmul.mubr.f32.gmra.mrb[0].mxu0 %v1190
        %v1270 = vpop.f32.mrb[0].mxu0
        %v1271 = vadd.f32 %v523, %v1270
        %v1272 = vpop.f32.mrb[0].mxu0
        %v1273 = vadd.f32 %v525, %v1272
        %1274 = vmatprep.mubr.f32.mxu0 0.0
        %1275 = vmatmul.mubr.f32.gmra.mrb[0].mxu0 %v1193
        %v1276 = vpop.f32.mrb[0].mxu0
        %v1277 = vadd.f32 %v529, %v1276
        %v1278 = vpop.f32.mrb[0].mxu0
        %v1279 = vadd.f32 %v531, %v1278
        %1280 = vmatprep.mubr.f32.mxu0 0.0
        %1281 = vmatmul.mubr.f32.gmra.mrb[0].mxu0 %v1196
        %v1282 = vpop.f32.mrb[0].mxu0
        %v1283 = vadd.f32 %v535, %v1282
        %v1284 = vpop.f32.mrb[0].mxu0
        %v1285 = vadd.f32 %v537, %v1284
        %1286 = vdwg.mxu0
        %1287 = vmatprep.subr.mxu0 %v1169
        %1288 = vmatpush1.msra.mxu0 %v1168
        %1289 = vmatprep.subr.mxu0 %v1173
        %1290 = vmatpush1.msra.mxu0 %v1172
        %1291 = vmatprep.subr.mxu0 %v1177
        %1292 = vmatpush1.msra.mxu0 %v1176
        %1293 = vmatprep.subr.mxu0 %v1181
        %1294 = vmatpush1.msra.mxu0 %v1180
        %1295 = vmatprep.subr.mxu0 0.0
        %1296 = vmatpush1.msra.mxu0 0.0
        %1297 = vmatprep.subr.mxu0 0.0
        %1298 = vmatpush1.msra.mxu0 0.0
        %1299 = vmatprep.subr.mxu0 0.0
        %1300 = vmatpush1.msra.mxu0 0.0
        %1301 = vmatprep.subr.mxu0 0.0
        %1302 = vmatpush1.msra.mxu0 0.0
        %1303 = vmatprep.subr.mxu0 0.0
        %1304 = vmatpush1.msra.mxu0 0.0
        %1305 = vmatprep.subr.mxu0 0.0
        %1306 = vmatpush1.msra.mxu0 0.0
        %1307 = vmatprep.subr.mxu0 0.0
        %1308 = vmatpush1.msra.mxu0 0.0
        %1309 = vmatprep.subr.mxu0 0.0
        %1310 = vmatpush1.msra.mxu0 0.0
        %1311 = vmatprep.subr.mxu0 0.0
        %1312 = vmatpush1.msra.mxu0 0.0
        %1313 = vmatprep.subr.mxu0 0.0
        %1314 = vmatpush1.msra.mxu0 0.0
        %1315 = vmatprep.subr.mxu0 0.0
        %1316 = vmatpush1.msra.mxu0 0.0
        %1317 = vmatprep.subr.mxu0 0.0
        %1318 = vmatpush1.msra.mxu0 0.0
        %1319 = vmatprep.subr.mxu0 0.0
        %1320 = vmatpush1.msra.mxu0 0.0
        %1321 = vmatprep.subr.mxu0 0.0
        %1322 = vmatpush1.msra.mxu0 0.0
        %1323 = vmatprep.subr.mxu0 0.0
        %1324 = vmatpush1.msra.mxu0 0.0
        %1325 = vmatprep.subr.mxu0 0.0
        %1326 = vmatpush1.msra.mxu0 0.0
        %1327 = vmatprep.subr.mxu0 0.0
        %1328 = vmatpush1.msra.mxu0 0.0
        %1329 = vmatprep.subr.mxu0 0.0
        %1330 = vmatpush1.msra.mxu0 0.0
        %1331 = vmatprep.subr.mxu0 0.0
        %1332 = vmatpush1.msra.mxu0 0.0
        %1333 = vmatprep.subr.mxu0 0.0
        %1334 = vmatpush1.msra.mxu0 0.0
        %1335 = vmatprep.subr.mxu0 0.0
        %1336 = vmatpush1.msra.mxu0 0.0
        %1337 = vmatprep.subr.mxu0 0.0
        %1338 = vmatpush1.msra.mxu0 0.0
        %1339 = vmatprep.subr.mxu0 0.0
        %1340 = vmatpush1.msra.mxu0 0.0
        %1341 = vmatprep.subr.mxu0 0.0
        %1342 = vmatpush1.msra.mxu0 0.0
        %1343 = vmatprep.subr.mxu0 0.0
        %1344 = vmatpush1.msra.mxu0 0.0
        %1345 = vmatprep.subr.mxu0 0.0
        %1346 = vmatpush1.msra.mxu0 0.0
        %1347 = vmatprep.subr.mxu0 0.0
        %1348 = vmatpush1.msra.mxu0 0.0
        %1349 = vmatprep.subr.mxu0 0.0
        %1350 = vmatpush1.msra.mxu0 0.0
        %1351 = vmatprep.mubr.f32.mxu0 0.0
        %1352 = vmatmul.mubr.f32.gmra.mrb[0].mxu0 %v1187
        %v1353 = vpop.f32.mrb[0].mxu0
        %v1354 = vadd.f32 %v660, %v1353
        %v1355 = vpop.f32.mrb[0].mxu0
        %v1356 = vadd.f32 %v662, %v1355
        %1357 = vmatprep.mubr.f32.mxu0 0.0
        %1358 = vmatmul.mubr.f32.gmra.mrb[0].mxu0 %v1190
        %v1359 = vpop.f32.mrb[0].mxu0
        %v1360 = vadd.f32 %v666, %v1359
        %v1361 = vpop.f32.mrb[0].mxu0
        %v1362 = vadd.f32 %v668, %v1361
        %1363 = vmatprep.mubr.f32.mxu0 0.0
        %1364 = vmatmul.mubr.f32.gmra.mrb[0].mxu0 %v1193
        %v1365 = vpop.f32.mrb[0].mxu0
        %v1366 = vadd.f32 %v672, %v1365
        %v1367 = vpop.f32.mrb[0].mxu0
        %v1368 = vadd.f32 %v674, %v1367
        %1369 = vmatprep.mubr.f32.mxu0 0.0
        %1370 = vmatmul.mubr.f32.gmra.mrb[0].mxu0 %v1196
        %v1371 = vpop.f32.mrb[0].mxu0
        %v1372 = vadd.f32 %v678, %v1371
        %v1373 = vpop.f32.mrb[0].mxu0
        %v1374 = vadd.f32 %v680, %v1373
        %1375 = vdwg.mxu0
        %1377 = vset.pattern.permute.xlu0 0
        %1378 = vperm.xlu0 %1377, %v331
        %v1379 = vpop.permute.xlu0 %1378
        %1382 = vset.pattern.permute.xlu0 0
        %1383 = vperm.xlu0 %1382, %v332
        %v1384 = vpop.permute.xlu0 %1383
        %1387 = vset.pattern.permute.xlu0 0
        %1388 = vperm.xlu0 %1387, %v333
        %v1389 = vpop.permute.xlu0 %1388
        %1392 = vset.pattern.permute.xlu0 0
        %1393 = vperm.xlu0 %1392, %v334
        %v1394 = vpop.permute.xlu0 %1393
        %v1396 = vadd.f32 %v1265, %v1379
        %v1397 = vadd.f32 %v1267, %v1379
        %v1398 = vadd.f32 %v1354, %v1379
        %v1399 = vadd.f32 %v1356, %v1379
        %v1400 = vadd.f32 %v1271, %v1384
        %v1401 = vadd.f32 %v1273, %v1384
        %v1402 = vadd.f32 %v1360, %v1384
        %v1403 = vadd.f32 %v1362, %v1384
        %v1404 = vadd.f32 %v1277, %v1389
        %v1405 = vadd.f32 %v1279, %v1389
        %v1406 = vadd.f32 %v1366, %v1389
        %v1407 = vadd.f32 %v1368, %v1389
        %v1408 = vadd.f32 %v1283, %v1394
        %v1409 = vadd.f32 %v1285, %v1394
        %v1410 = vadd.f32 %v1372, %v1394
        %v1411 = vadd.f32 %v1374, %v1394
        %v1412 = vmax.f32 %v1396, 0.0
        %v1413 = vmax.f32 %v1397, 0.0
        %v1414 = vmax.f32 %v1398, 0.0
        %v1415 = vmax.f32 %v1399, 0.0
        %v1416 = vmax.f32 %v1400, 0.0
        %v1417 = vmax.f32 %v1401, 0.0
        %v1418 = vmax.f32 %v1402, 0.0
        %v1419 = vmax.f32 %v1403, 0.0
        %v1420 = vmax.f32 %v1404, 0.0
        %v1421 = vmax.f32 %v1405, 0.0
        %v1422 = vmax.f32 %v1406, 0.0
        %v1423 = vmax.f32 %v1407, 0.0
        %v1424 = vmax.f32 %v1408, 0.0
        %v1425 = vmax.f32 %v1409, 0.0
        %v1426 = vmax.f32 %v1410, 0.0
        %v1427 = vmax.f32 %v1411, 0.0
        %v1428 = vld [vmem:[%s3 + $0x40] sm:$0xff]
        %v1430 = vsel %vm939, %v1428, 0
        %1432 = vmatprep.subr.mxu0 %v1413
        %1433 = vmatpush1.msra.mxu0 %v1412
        %1434 = vmatprep.subr.mxu0 %v1417
        %1435 = vmatpush1.msra.mxu0 %v1416
        %1436 = vmatprep.subr.mxu0 %v1421
        %1437 = vmatpush1.msra.mxu0 %v1420
        %1438 = vmatprep.subr.mxu0 %v1425
        %1439 = vmatpush1.msra.mxu0 %v1424
        %1440 = vmatprep.subr.mxu0 0.0
        %1441 = vmatpush1.msra.mxu0 0.0
        %1442 = vmatprep.subr.mxu0 0.0
        %1443 = vmatpush1.msra.mxu0 0.0
        %1444 = vmatprep.subr.mxu0 0.0
        %1445 = vmatpush1.msra.mxu0 0.0
        %1446 = vmatprep.subr.mxu0 0.0
        %1447 = vmatpush1.msra.mxu0 0.0
        %1448 = vmatprep.subr.mxu0 0.0
        %1449 = vmatpush1.msra.mxu0 0.0
        %1450 = vmatprep.subr.mxu0 0.0
        %1451 = vmatpush1.msra.mxu0 0.0
        %1452 = vmatprep.subr.mxu0 0.0
        %1453 = vmatpush1.msra.mxu0 0.0
        %1454 = vmatprep.subr.mxu0 0.0
        %1455 = vmatpush1.msra.mxu0 0.0
        %1456 = vmatprep.subr.mxu0 0.0
        %1457 = vmatpush1.msra.mxu0 0.0
        %1458 = vmatprep.subr.mxu0 0.0
        %1459 = vmatpush1.msra.mxu0 0.0
        %1460 = vmatprep.subr.mxu0 0.0
        %1461 = vmatpush1.msra.mxu0 0.0
        %1462 = vmatprep.subr.mxu0 0.0
        %1463 = vmatpush1.msra.mxu0 0.0
        %1464 = vmatprep.subr.mxu0 0.0
        %1465 = vmatpush1.msra.mxu0 0.0
        %1466 = vmatprep.subr.mxu0 0.0
        %1467 = vmatpush1.msra.mxu0 0.0
        %1468 = vmatprep.subr.mxu0 0.0
        %1469 = vmatpush1.msra.mxu0 0.0
        %1470 = vmatprep.subr.mxu0 0.0
        %1471 = vmatpush1.msra.mxu0 0.0
        %1472 = vmatprep.subr.mxu0 0.0
        %1473 = vmatpush1.msra.mxu0 0.0
        %1474 = vmatprep.subr.mxu0 0.0
        %1475 = vmatpush1.msra.mxu0 0.0
        %1476 = vmatprep.subr.mxu0 0.0
        %1477 = vmatpush1.msra.mxu0 0.0
        %1478 = vmatprep.subr.mxu0 0.0
        %1479 = vmatpush1.msra.mxu0 0.0
        %1480 = vmatprep.subr.mxu0 0.0
        %1481 = vmatpush1.msra.mxu0 0.0
        %1482 = vmatprep.subr.mxu0 0.0
        %1483 = vmatpush1.msra.mxu0 0.0
        %1484 = vmatprep.subr.mxu0 0.0
        %1485 = vmatpush1.msra.mxu0 0.0
        %1486 = vmatprep.subr.mxu0 0.0
        %1487 = vmatpush1.msra.mxu0 0.0
        %1488 = vmatprep.subr.mxu0 0.0
        %1489 = vmatpush1.msra.mxu0 0.0
        %1490 = vmatprep.subr.mxu0 0.0
        %1491 = vmatpush1.msra.mxu0 0.0
        %1492 = vmatprep.subr.mxu0 0.0
        %1493 = vmatpush1.msra.mxu0 0.0
        %1494 = vmatprep.subr.mxu0 0.0
        %1495 = vmatpush1.msra.mxu0 0.0
        %1496 = vmatprep.mubr.f32.mxu0 0.0
        %1497 = vmatmul.mubr.f32.gmra.mrb[0].mxu0 %v1430
        %v1498 = vpop.f32.mrb[0].mxu0
        %v1499 = vadd.f32 %v541, %v1498
        %v1500 = vpop.f32.mrb[0].mxu0
        %v1501 = vadd.f32 %v543, %v1500
        %1502 = vdwg.mxu0
        %1503 = vmatprep.subr.mxu0 %v1415
        %1504 = vmatpush1.msra.mxu0 %v1414
        %1505 = vmatprep.subr.mxu0 %v1419
        %1506 = vmatpush1.msra.mxu0 %v1418
        %1507 = vmatprep.subr.mxu0 %v1423
        %1508 = vmatpush1.msra.mxu0 %v1422
        %1509 = vmatprep.subr.mxu0 %v1427
        %1510 = vmatpush1.msra.mxu0 %v1426
        %1511 = vmatprep.subr.mxu0 0.0
        %1512 = vmatpush1.msra.mxu0 0.0
        %1513 = vmatprep.subr.mxu0 0.0
        %1514 = vmatpush1.msra.mxu0 0.0
        %1515 = vmatprep.subr.mxu0 0.0
        %1516 = vmatpush1.msra.mxu0 0.0
        %1517 = vmatprep.subr.mxu0 0.0
        %1518 = vmatpush1.msra.mxu0 0.0
        %1519 = vmatprep.subr.mxu0 0.0
        %1520 = vmatpush1.msra.mxu0 0.0
        %1521 = vmatprep.subr.mxu0 0.0
        %1522 = vmatpush1.msra.mxu0 0.0
        %1523 = vmatprep.subr.mxu0 0.0
        %1524 = vmatpush1.msra.mxu0 0.0
        %1525 = vmatprep.subr.mxu0 0.0
        %1526 = vmatpush1.msra.mxu0 0.0
        %1527 = vmatprep.subr.mxu0 0.0
        %1528 = vmatpush1.msra.mxu0 0.0
        %1529 = vmatprep.subr.mxu0 0.0
        %1530 = vmatpush1.msra.mxu0 0.0
        %1531 = vmatprep.subr.mxu0 0.0
        %1532 = vmatpush1.msra.mxu0 0.0
        %1533 = vmatprep.subr.mxu0 0.0
        %1534 = vmatpush1.msra.mxu0 0.0
        %1535 = vmatprep.subr.mxu0 0.0
        %1536 = vmatpush1.msra.mxu0 0.0
        %1537 = vmatprep.subr.mxu0 0.0
        %1538 = vmatpush1.msra.mxu0 0.0
        %1539 = vmatprep.subr.mxu0 0.0
        %1540 = vmatpush1.msra.mxu0 0.0
        %1541 = vmatprep.subr.mxu0 0.0
        %1542 = vmatpush1.msra.mxu0 0.0
        %1543 = vmatprep.subr.mxu0 0.0
        %1544 = vmatpush1.msra.mxu0 0.0
        %1545 = vmatprep.subr.mxu0 0.0
        %1546 = vmatpush1.msra.mxu0 0.0
        %1547 = vmatprep.subr.mxu0 0.0
        %1548 = vmatpush1.msra.mxu0 0.0
        %1549 = vmatprep.subr.mxu0 0.0
        %1550 = vmatpush1.msra.mxu0 0.0
        %1551 = vmatprep.subr.mxu0 0.0
        %1552 = vmatpush1.msra.mxu0 0.0
        %1553 = vmatprep.subr.mxu0 0.0
        %1554 = vmatpush1.msra.mxu0 0.0
        %1555 = vmatprep.subr.mxu0 0.0
        %1556 = vmatpush1.msra.mxu0 0.0
        %1557 = vmatprep.subr.mxu0 0.0
        %1558 = vmatpush1.msra.mxu0 0.0
        %1559 = vmatprep.subr.mxu0 0.0
        %1560 = vmatpush1.msra.mxu0 0.0
        %1561 = vmatprep.subr.mxu0 0.0
        %1562 = vmatpush1.msra.mxu0 0.0
        %1563 = vmatprep.subr.mxu0 0.0
        %1564 = vmatpush1.msra.mxu0 0.0
        %1565 = vmatprep.subr.mxu0 0.0
        %1566 = vmatpush1.msra.mxu0 0.0
        %1567 = vmatprep.mubr.f32.mxu0 0.0
        %1568 = vmatmul.mubr.f32.gmra.mrb[0].mxu0 %v1430
        %v1569 = vpop.f32.mrb[0].mxu0
        %v1570 = vadd.f32 %v684, %v1569
        %v1571 = vpop.f32.mrb[0].mxu0
        %v1572 = vadd.f32 %v686, %v1571
        %1573 = vdwg.mxu0
        %1575 = vset.pattern.permute.xlu0 0
        %1576 = vperm.xlu0 %1575, %v335
        %v1577 = vpop.permute.xlu0 %1576
        %v1579 = vadd.f32 %v1499, %v1577
        %v1580 = vadd.f32 %v1501, %v1577
        %v1581 = vadd.f32 %v1570, %v1577
        %v1582 = vadd.f32 %v1572, %v1577
        %v1587 = vcombine.low %v1579, %v1580
        %v1588 = vcombine.low %v1581, %v1582
        %1591 = vst [vmem:[%s295] sm:$0xff] %v1587
        %1592 = vst [vmem:[%s295 + $0x8] sm:$0xff] %v1588
        %s1593 = sand.u32 %s182, 1
        %s1594 = scalar_lea.sflag [#allocation3], %s1593
        %s1595 = sand.u32 %s182, 1
        %s1596 = smul.addr %s1595, 16
        %s1597 = scalar_lea.vmem [#allocation2], %s1596
        // Predicated region
        $region45: #{tpu_custom_call.1} parent=43 // pred_check
          %p1598 = pneg %p192
        $region46: #{tpu_custom_call.1} parent=43 // pred_check_branch
          %1600 = sbr.rel (%p1598) target = $region48
        $region47: #{tpu_custom_call.1} parent=43 // pred_region
          %s1601 = smul.u32 4, %s25
          %s1603 = ssub.s32 256, 256
          %1604 = vsyncadd %s1594, %s1603
          %s1605 = smul.addr %s24, 8
          %s1606 = sadd.s32 %s1601, %s1605
          %s1607 = smul.addr %s1606, 64
          %s1608 = scalar_lea.hbm %s6, %s1607
          %s1610 = sshll.u32 %s1597, 4
          %s1611 = int_to_ptr.vmem [resolvable:$true] %s1610
          %1613 = dma.vmem_to_hbm [thread:$0]  %s1611, 256, %s1608, %s1594
        $region48: #{tpu_custom_call.1} parent=43 // pred_fallthru
          _
      $region44: #{tpu_custom_call.1} parent=5 // pred_fallthru
        _
      %p1614 = scmp.le.s32.totalorder 2, %s15
      // Predicated region
      $region49: #{tpu_custom_call.1} parent=5 // pred_check
        %p1615 = pneg %p1614
      $region50: #{tpu_custom_call.1} parent=5 // pred_check_branch
        %1617 = sbr.rel (%p1615) target = $region52
      $region51: #{tpu_custom_call.1} parent=5 // pred_region
        %s1618 = ssub.s32 %s15, 2
        // Predicated region
        $region53: #{tpu_custom_call.1} parent=51 // pred_check
          %p1619 = pneg %p198
        $region54: #{tpu_custom_call.1} parent=51 // pred_check_branch
          %1621 = sbr.rel (%p1619) target = $region56
        $region55: #{tpu_custom_call.1} parent=51 // pred_region
          %s1622 = sand.u32 %s183, 1
          %s1623 = scalar_lea.sflag [#allocation3], %s1622
          %s1624 = sand.u32 %s183, 1
          %s1625 = smul.addr %s1624, 16
          %s1626 = scalar_lea.vmem [#allocation2], %s1625
          %1627 = dma.done %s1623, 256
        $region56: #{tpu_custom_call.1} parent=51 // pred_fallthru
          _
      $region52: #{tpu_custom_call.1} parent=5 // pred_fallthru
        _
    $region6: #{tpu_custom_call.1} parent=1 // loop_footer
      %s19 = sadd.s32 1, %s15
    $region7: #{tpu_custom_call.1} parent=1 // loop_footer_branch
      %14 = sbr.rel target = $region3
    $region8: #{tpu_custom_call.1} parent=1 // loop_exit
      _
    %1628 = vsyncpa [#allocation3], 1
    %s1629 = scalar_lea.sflag [#allocation3], 1
    %1630 = vsyncpa %s1629, 1

</llo_original>
